<compile_context>
chip_gen: v7x
topology: tpu7x:2x2x1
jax: 0.10.0
libtpu: 0.0.40
codegen_flags: <defaults>
</compile_context>

<pallas_src>
import functools

import jax
import jax.numpy as jnp
import numpy as np
from jax import lax
from jax.experimental import pallas as pl
from jax.experimental.pallas import tpu as pltpu

LEAK = 0.3
EPS = 1e-5


def _leaky(x):
    return jnp.where(x >= 0, x, LEAK * x)


def residual_block_kernel(col1_ref, w1s_ref, s1_ref, t1_ref,
                          w2s_ref, s2_ref, t2_ref, bs_ref, sel_ref,
                          out_ref, *, C_out):
    """One batch sample per grid step; everything lane-dense (last dim = H*W)."""
    col1 = col1_ref[0]                                         # (9*C_in, P)

    # ---- stage 1: conv1 (3x3) and the 1x1 shortcut fused into one MXU matmul ----
    r = jnp.dot(w1s_ref[...], col1,
                preferred_element_type=jnp.float32)            # (2*C_out, P)
    h1 = _leaky(r[:C_out, :] * s1_ref[...] + t1_ref[...])      # BN1 (eval) folded
    sc = r[C_out:, :] + bs_ref[...]                            # shortcut + its bias

    # ---- stage 2: conv2 (3x3) ----
    # g[t*C_out + co, p] = sum_c W2[co, c, tap t] * h1[c, p]
    g = jnp.dot(w2s_ref[...], h1,
                preferred_element_type=jnp.float32)            # (9*C_out, P)
    # Halo gather per tap as a 0/1 selection matmul (MXU, lane-aligned, no scratch).
    acc = jnp.zeros_like(h1)                                   # (C_out, P)
    for t in range(9):
        acc = acc + jnp.dot(g[t * C_out:(t + 1) * C_out, :], sel_ref[t],
                            preferred_element_type=jnp.float32)
    h2 = _leaky(acc * s2_ref[...] + t2_ref[...])               # BN2 (eval) folded
    # Dropout(0.1) is identity in eval mode.

    out_ref[0] = (h2 + sc).astype(out_ref.dtype)


def residual_block(x, p):
    """x: (N, C_in, H, W) float32 -> (N, C_out, H, W) float32 (eval-mode forward)."""
    N, C_in, H, W = x.shape
    C_out = p['w1'].shape[0]
    P = H * W

    xf = x.astype(jnp.float32)

    # ---- im2col for conv1 (pure layout plumbing, done once in plain JAX) ----
    x_pad = jnp.pad(xf, ((0, 0), (0, 0), (1, 1), (1, 1)))
    cols = [x_pad[:, :, kh:kh + H, kw:kw + W].reshape(N, C_in, P)
            for kh in range(3) for kw in range(3)]
    col1 = jnp.concatenate(cols, axis=1)                       # (N, 9*C_in, P)

    # ---- conv1 + shortcut weights fused into a single (2*C_out, 9*C_in) matrix ----
    w1m = jnp.transpose(p['w1'], (0, 2, 3, 1)).reshape(C_out, 9 * C_in)
    ws = p['ws'][:, :, 0, 0]                                   # (C_out, C_in)
    ws_embed = jnp.zeros((C_out, 9 * C_in), jnp.float32)
    ws_embed = ws_embed.at[:, 4 * C_in:5 * C_in].set(ws)       # centre tap == x itself
    w1s = jnp.concatenate([w1m, ws_embed], axis=0)             # (2*C_out, 9*C_in)

    # ---- conv2 weights, one (C_out, C_out) block per tap, tap-major rows ----
    w2s = jnp.transpose(p['w2'], (2, 3, 0, 1)).reshape(9 * C_out, C_out)

    # ---- fold conv bias + eval-mode BatchNorm into per-channel scale/shift ----
    def fold(b, gamma, beta, mean, var):
        scale = gamma / jnp.sqrt(var + EPS)
        shift = b * scale + beta - mean * scale
        return scale.reshape(C_out, 1), shift.reshape(C_out, 1)

    s1, t1 = fold(p['b1'], p['g1'], p['be1'], p['m1'], p['v1'])
    s2, t2 = fold(p['b2'], p['g2'], p['be2'], p['m2'], p['v2'])
    bs = p['bs'].reshape(C_out, 1)

    # ---- 0/1 shift+mask matrices realising conv2's 3x3 halo, one per tap ----
    # sel[t, q, p] = 1  iff  q == flat index of (h+dh, w+dw) and that pixel is in-bounds.
    pidx = np.arange(P)
    hp, wp = pidx // W, pidx % W
    sel_np = np.zeros((9, P, P), np.float32)
    t = 0
    for kh in range(3):
        for kw in range(3):
            dh, dw = kh - 1, kw - 1
            valid = ((hp + dh >= 0) & (hp + dh < H) &
                     (wp + dw >= 0) & (wp + dw < W))
            src = (hp + dh) * W + (wp + dw)
            sel_np[t, src[valid], pidx[valid]] = 1.0
            t += 1
    sel = jnp.asarray(sel_np)                                  # (9, P, P)

    kernel = functools.partial(residual_block_kernel, C_out=C_out)

    def const(shape):
        return pl.BlockSpec(shape, lambda n: (0,) * len(shape))

    out_flat = pl.pallas_call(
        kernel,
        out_shape=jax.ShapeDtypeStruct((N, C_out, P), jnp.float32),
        grid=(N,),
        in_specs=[
            pl.BlockSpec((1, 9 * C_in, P), lambda n: (n, 0, 0)),   # im2col, per sample
            const((2 * C_out, 9 * C_in)),                          # fused conv1+shortcut W
            const((C_out, 1)), const((C_out, 1)),                  # BN1 scale/shift
            const((9 * C_out, C_out)),                             # conv2 per-tap weights
            const((C_out, 1)), const((C_out, 1)),                  # BN2 scale/shift
            const((C_out, 1)),                                     # shortcut bias
            const((9, P, P)),                                      # selection matrices
        ],
        out_specs=pl.BlockSpec((1, C_out, P), lambda n: (n, 0, 0)),  # lane-dense output
        compiler_params=pltpu.CompilerParams(
            dimension_semantics=("parallel",),
            vmem_limit_bytes=32 * 1024 * 1024,
        ),
    )(col1, w1s, s1, t1, w2s, s2, t2, bs, sel)

    return out_flat.reshape(N, C_out, H, W)


def init_params(key, C_in, C_out):
    ks = jax.random.split(key, 6)
    p = {
        'w1': 0.1 * jax.random.normal(ks[0], (C_out, C_in, 3, 3), jnp.float32),
        'b1': 0.05 * jax.random.normal(ks[1], (C_out,), jnp.float32),
        'w2': 0.1 * jax.random.normal(ks[2], (C_out, C_out, 3, 3), jnp.float32),
        'b2': 0.05 * jax.random.normal(ks[3], (C_out,), jnp.float32),
        'ws': 0.1 * jax.random.normal(ks[4], (C_out, C_in, 1, 1), jnp.float32),
        'bs': 0.05 * jax.random.normal(ks[5], (C_out,), jnp.float32),
    }
    ar = jnp.arange(C_out, dtype=jnp.float32)
    # BatchNorm2d params / running stats (eval mode), deterministic & non-trivial.
    p.update(g1=1.0 + 0.10 * ar, be1=0.01 * ar, m1=0.02 * ar, v1=1.0 + 0.05 * ar)
    p.update(g2=1.0 - 0.05 * ar, be2=-0.01 * ar, m2=-0.03 * ar, v2=1.0 + 0.10 * ar)
    return p


def ref_forward(x, p):
    """Pure-JAX reference of the PyTorch forward (eval mode, no-NaN branch)."""
    xf = x.astype(jnp.float32)

    def conv(inp, w, b, pad):
        o = lax.conv_general_dilated(
            inp, w, (1, 1), [(pad, pad), (pad, pad)],
            dimension_numbers=('NCHW', 'OIHW', 'NCHW'),
            precision=lax.Precision.HIGHEST)
        return o + b[None, :, None, None]

    def bn(y, g, be, m, v):
        sh = lambda a: a[None, :, None, None]
        return (y - sh(m)) / jnp.sqrt(sh(v) + EPS) * sh(g) + sh(be)

    lr = lambda y: jnp.where(y >= 0, y, LEAK * y)
    h = lr(bn(conv(xf, p['w1'], p['b1'], 1), p['g1'], p['be1'], p['m1'], p['v1']))
    h = lr(bn(conv(h, p['w2'], p['b2'], 1), p['g2'], p['be2'], p['m2'], p['v2']))
    sc = conv(xf, p['ws'], p['bs'], 0)
    return h + sc


if __name__ == "__main__":
    # (N, C_in, H, W); in_channels != out_channels -> 1x1 shortcut conv is active.
    N, C_in, C_out, H, W = 2, 4, 8, 16, 16
    key = jax.random.PRNGKey(0)
    kx, kp = jax.random.split(key)
    x = jax.random.normal(kx, (N, C_in, H, W), jnp.float32)
    params = init_params(kp, C_in, C_out)

    fwd = jax.jit(residual_block)
    out = jax.block_until_ready(fwd(x, params))
    ref = jax.block_until_ready(ref_forward(x, params))
    np.testing.assert_allclose(np.asarray(out), np.asarray(ref),
                               rtol=2e-4, atol=2e-4)
    print("KERNEL_OK")
</pallas_src>

<mosaic_0001>
module attributes {stable_mosaic.version = 11 : i64} {
  func.func @residual_block_kernel(%arg0: i32, %arg1: memref<1x36x256xf32, #tpu.memory_space<vmem>>, %arg2: memref<16x36xf32, #tpu.memory_space<vmem>>, %arg3: memref<8x1xf32, #tpu.memory_space<vmem>>, %arg4: memref<8x1xf32, #tpu.memory_space<vmem>>, %arg5: memref<72x8xf32, #tpu.memory_space<vmem>>, %arg6: memref<8x1xf32, #tpu.memory_space<vmem>>, %arg7: memref<8x1xf32, #tpu.memory_space<vmem>>, %arg8: memref<8x1xf32, #tpu.memory_space<vmem>>, %arg9: memref<9x256x256xf32, #tpu.memory_space<vmem>>, %arg10: memref<1x8x256xf32, #tpu.memory_space<vmem>>) attributes {dimension_semantics = [#tpu.dimension_semantics<parallel>], iteration_bounds = array<i64: 2>, scalar_prefetch = 0 : i64, scratch_operands = 0 : i64, tpu.core_type = #tpu.core_type<tc>, window_params = [{transform_indices = @transform_0, window_bounds = array<i64: 1, 36, 256>}, {pipeline_mode = #tpu.pipeline_mode<synchronous>, transform_indices = @transform_1, window_bounds = array<i64: 16, 36>}, {pipeline_mode = #tpu.pipeline_mode<synchronous>, transform_indices = @transform_2, window_bounds = array<i64: 8, 1>}, {pipeline_mode = #tpu.pipeline_mode<synchronous>, transform_indices = @transform_3, window_bounds = array<i64: 8, 1>}, {pipeline_mode = #tpu.pipeline_mode<synchronous>, transform_indices = @transform_4, window_bounds = array<i64: 72, 8>}, {pipeline_mode = #tpu.pipeline_mode<synchronous>, transform_indices = @transform_5, window_bounds = array<i64: 8, 1>}, {pipeline_mode = #tpu.pipeline_mode<synchronous>, transform_indices = @transform_6, window_bounds = array<i64: 8, 1>}, {pipeline_mode = #tpu.pipeline_mode<synchronous>, transform_indices = @transform_7, window_bounds = array<i64: 8, 1>}, {pipeline_mode = #tpu.pipeline_mode<synchronous>, transform_indices = @transform_8, window_bounds = array<i64: 9, 256, 256>}, {transform_indices = @transform_9, window_bounds = array<i64: 1, 8, 256>}]} {
    %c0 = arith.constant 0 : index
    %c0_0 = arith.constant 0 : index
    %c0_1 = arith.constant 0 : index
    %0 = vector.load %arg1[%c0, %c0_0, %c0_1] : memref<1x36x256xf32, #tpu.memory_space<vmem>>, vector<1x36x256xf32>
    %1 = vector.shape_cast %0 : vector<1x36x256xf32> to vector<36x256xf32>
    %c0_2 = arith.constant 0 : index
    %c0_3 = arith.constant 0 : index
    %2 = vector.load %arg2[%c0_2, %c0_3] : memref<16x36xf32, #tpu.memory_space<vmem>>, vector<16x36xf32>
    %cst = arith.constant dense<0.000000e+00> : vector<16x256xf32>
    %3 = tpu.matmul %2, %1, %cst {dimension_numbers = #tpu.dot_dimension_numbers<[1], [0], [0], [1], [0, 0, 1, 1], [], []>} : vector<16x36xf32>, vector<36x256xf32>, vector<16x256xf32> -> vector<16x256xf32>
    %4 = vector.extract_strided_slice %3 {offsets = [0, 0], sizes = [8, 256], strides = [1, 1]} : vector<16x256xf32> to vector<8x256xf32>
    %c0_4 = arith.constant 0 : index
    %c0_5 = arith.constant 0 : index
    %5 = vector.load %arg3[%c0_4, %c0_5] : memref<8x1xf32, #tpu.memory_space<vmem>>, vector<8x1xf32>
    %6 = vector.broadcast %5 : vector<8x1xf32> to vector<8x256xf32>
    %7 = arith.mulf %4, %6 : vector<8x256xf32>
    %c0_6 = arith.constant 0 : index
    %c0_7 = arith.constant 0 : index
    %8 = vector.load %arg4[%c0_6, %c0_7] : memref<8x1xf32, #tpu.memory_space<vmem>>, vector<8x1xf32>
    %9 = vector.broadcast %8 : vector<8x1xf32> to vector<8x256xf32>
    %10 = arith.addf %7, %9 : vector<8x256xf32>
    %cst_8 = arith.constant 0.000000e+00 : f32
    %11 = vector.broadcast %cst_8 : f32 to vector<8x256xf32>
    %12 = arith.cmpf oge, %10, %11 : vector<8x256xf32>
    %cst_9 = arith.constant 3.000000e-01 : f32
    %13 = vector.broadcast %cst_9 : f32 to vector<8x256xf32>
    %14 = arith.mulf %13, %10 : vector<8x256xf32>
    %15 = arith.select %12, %10, %14 : vector<8x256xi1>, vector<8x256xf32>
    %16 = vector.extract_strided_slice %3 {offsets = [8, 0], sizes = [8, 256], strides = [1, 1]} : vector<16x256xf32> to vector<8x256xf32>
    %c0_10 = arith.constant 0 : index
    %c0_11 = arith.constant 0 : index
    %17 = vector.load %arg8[%c0_10, %c0_11] : memref<8x1xf32, #tpu.memory_space<vmem>>, vector<8x1xf32>
    %18 = vector.broadcast %17 : vector<8x1xf32> to vector<8x256xf32>
    %19 = arith.addf %16, %18 : vector<8x256xf32>
    %c0_12 = arith.constant 0 : index
    %c0_13 = arith.constant 0 : index
    %20 = vector.load %arg5[%c0_12, %c0_13] : memref<72x8xf32, #tpu.memory_space<vmem>>, vector<72x8xf32>
    %cst_14 = arith.constant dense<0.000000e+00> : vector<72x256xf32>
    %21 = tpu.matmul %20, %15, %cst_14 {dimension_numbers = #tpu.dot_dimension_numbers<[1], [0], [0], [1], [0, 0, 1, 1], [], []>} : vector<72x8xf32>, vector<8x256xf32>, vector<72x256xf32> -> vector<72x256xf32>
    %cst_15 = arith.constant 0.000000e+00 : f32
    %22 = vector.broadcast %cst_15 : f32 to vector<8x256xf32>
    %23 = vector.extract_strided_slice %21 {offsets = [0, 0], sizes = [8, 256], strides = [1, 1]} : vector<72x256xf32> to vector<8x256xf32>
    %c0_16 = arith.constant 0 : index
    %c0_17 = arith.constant 0 : index
    %c0_18 = arith.constant 0 : index
    %24 = vector.load %arg9[%c0_16, %c0_17, %c0_18] : memref<9x256x256xf32, #tpu.memory_space<vmem>>, vector<1x256x256xf32>
    %25 = vector.shape_cast %24 : vector<1x256x256xf32> to vector<256x256xf32>
    %cst_19 = arith.constant dense<0.000000e+00> : vector<8x256xf32>
    %26 = tpu.matmul %23, %25, %cst_19 {dimension_numbers = #tpu.dot_dimension_numbers<[1], [0], [0], [1], [0, 0, 1, 1], [], []>} : vector<8x256xf32>, vector<256x256xf32>, vector<8x256xf32> -> vector<8x256xf32>
    %27 = arith.addf %22, %26 : vector<8x256xf32>
    %28 = vector.extract_strided_slice %21 {offsets = [8, 0], sizes = [8, 256], strides = [1, 1]} : vector<72x256xf32> to vector<8x256xf32>
    %c1 = arith.constant 1 : index
    %c0_20 = arith.constant 0 : index
    %c0_21 = arith.constant 0 : index
    %29 = vector.load %arg9[%c1, %c0_20, %c0_21] : memref<9x256x256xf32, #tpu.memory_space<vmem>>, vector<1x256x256xf32>
    %30 = vector.shape_cast %29 : vector<1x256x256xf32> to vector<256x256xf32>
    %cst_22 = arith.constant dense<0.000000e+00> : vector<8x256xf32>
    %31 = tpu.matmul %28, %30, %cst_22 {dimension_numbers = #tpu.dot_dimension_numbers<[1], [0], [0], [1], [0, 0, 1, 1], [], []>} : vector<8x256xf32>, vector<256x256xf32>, vector<8x256xf32> -> vector<8x256xf32>
    %32 = arith.addf %27, %31 : vector<8x256xf32>
    %33 = vector.extract_strided_slice %21 {offsets = [16, 0], sizes = [8, 256], strides = [1, 1]} : vector<72x256xf32> to vector<8x256xf32>
    %c2 = arith.constant 2 : index
    %c0_23 = arith.constant 0 : index
    %c0_24 = arith.constant 0 : index
    %34 = vector.load %arg9[%c2, %c0_23, %c0_24] : memref<9x256x256xf32, #tpu.memory_space<vmem>>, vector<1x256x256xf32>
    %35 = vector.shape_cast %34 : vector<1x256x256xf32> to vector<256x256xf32>
    %cst_25 = arith.constant dense<0.000000e+00> : vector<8x256xf32>
    %36 = tpu.matmul %33, %35, %cst_25 {dimension_numbers = #tpu.dot_dimension_numbers<[1], [0], [0], [1], [0, 0, 1, 1], [], []>} : vector<8x256xf32>, vector<256x256xf32>, vector<8x256xf32> -> vector<8x256xf32>
    %37 = arith.addf %32, %36 : vector<8x256xf32>
    %38 = vector.extract_strided_slice %21 {offsets = [24, 0], sizes = [8, 256], strides = [1, 1]} : vector<72x256xf32> to vector<8x256xf32>
    %c3 = arith.constant 3 : index
    %c0_26 = arith.constant 0 : index
    %c0_27 = arith.constant 0 : index
    %39 = vector.load %arg9[%c3, %c0_26, %c0_27] : memref<9x256x256xf32, #tpu.memory_space<vmem>>, vector<1x256x256xf32>
    %40 = vector.shape_cast %39 : vector<1x256x256xf32> to vector<256x256xf32>
    %cst_28 = arith.constant dense<0.000000e+00> : vector<8x256xf32>
    %41 = tpu.matmul %38, %40, %cst_28 {dimension_numbers = #tpu.dot_dimension_numbers<[1], [0], [0], [1], [0, 0, 1, 1], [], []>} : vector<8x256xf32>, vector<256x256xf32>, vector<8x256xf32> -> vector<8x256xf32>
    %42 = arith.addf %37, %41 : vector<8x256xf32>
    %43 = vector.extract_strided_slice %21 {offsets = [32, 0], sizes = [8, 256], strides = [1, 1]} : vector<72x256xf32> to vector<8x256xf32>
    %c4 = arith.constant 4 : index
    %c0_29 = arith.constant 0 : index
    %c0_30 = arith.constant 0 : index
    %44 = vector.load %arg9[%c4, %c0_29, %c0_30] : memref<9x256x256xf32, #tpu.memory_space<vmem>>, vector<1x256x256xf32>
    %45 = vector.shape_cast %44 : vector<1x256x256xf32> to vector<256x256xf32>
    %cst_31 = arith.constant dense<0.000000e+00> : vector<8x256xf32>
    %46 = tpu.matmul %43, %45, %cst_31 {dimension_numbers = #tpu.dot_dimension_numbers<[1], [0], [0], [1], [0, 0, 1, 1], [], []>} : vector<8x256xf32>, vector<256x256xf32>, vector<8x256xf32> -> vector<8x256xf32>
    %47 = arith.addf %42, %46 : vector<8x256xf32>
    %48 = vector.extract_strided_slice %21 {offsets = [40, 0], sizes = [8, 256], strides = [1, 1]} : vector<72x256xf32> to vector<8x256xf32>
    %c5 = arith.constant 5 : index
    %c0_32 = arith.constant 0 : index
    %c0_33 = arith.constant 0 : index
    %49 = vector.load %arg9[%c5, %c0_32, %c0_33] : memref<9x256x256xf32, #tpu.memory_space<vmem>>, vector<1x256x256xf32>
    %50 = vector.shape_cast %49 : vector<1x256x256xf32> to vector<256x256xf32>
    %cst_34 = arith.constant dense<0.000000e+00> : vector<8x256xf32>
    %51 = tpu.matmul %48, %50, %cst_34 {dimension_numbers = #tpu.dot_dimension_numbers<[1], [0], [0], [1], [0, 0, 1, 1], [], []>} : vector<8x256xf32>, vector<256x256xf32>, vector<8x256xf32> -> vector<8x256xf32>
    %52 = arith.addf %47, %51 : vector<8x256xf32>
    %53 = vector.extract_strided_slice %21 {offsets = [48, 0], sizes = [8, 256], strides = [1, 1]} : vector<72x256xf32> to vector<8x256xf32>
    %c6 = arith.constant 6 : index
    %c0_35 = arith.constant 0 : index
    %c0_36 = arith.constant 0 : index
    %54 = vector.load %arg9[%c6, %c0_35, %c0_36] : memref<9x256x256xf32, #tpu.memory_space<vmem>>, vector<1x256x256xf32>
    %55 = vector.shape_cast %54 : vector<1x256x256xf32> to vector<256x256xf32>
    %cst_37 = arith.constant dense<0.000000e+00> : vector<8x256xf32>
    %56 = tpu.matmul %53, %55, %cst_37 {dimension_numbers = #tpu.dot_dimension_numbers<[1], [0], [0], [1], [0, 0, 1, 1], [], []>} : vector<8x256xf32>, vector<256x256xf32>, vector<8x256xf32> -> vector<8x256xf32>
    %57 = arith.addf %52, %56 : vector<8x256xf32>
    %58 = vector.extract_strided_slice %21 {offsets = [56, 0], sizes = [8, 256], strides = [1, 1]} : vector<72x256xf32> to vector<8x256xf32>
    %c7 = arith.constant 7 : index
    %c0_38 = arith.constant 0 : index
    %c0_39 = arith.constant 0 : index
    %59 = vector.load %arg9[%c7, %c0_38, %c0_39] : memref<9x256x256xf32, #tpu.memory_space<vmem>>, vector<1x256x256xf32>
    %60 = vector.shape_cast %59 : vector<1x256x256xf32> to vector<256x256xf32>
    %cst_40 = arith.constant dense<0.000000e+00> : vector<8x256xf32>
    %61 = tpu.matmul %58, %60, %cst_40 {dimension_numbers = #tpu.dot_dimension_numbers<[1], [0], [0], [1], [0, 0, 1, 1], [], []>} : vector<8x256xf32>, vector<256x256xf32>, vector<8x256xf32> -> vector<8x256xf32>
    %62 = arith.addf %57, %61 : vector<8x256xf32>
    %63 = vector.extract_strided_slice %21 {offsets = [64, 0], sizes = [8, 256], strides = [1, 1]} : vector<72x256xf32> to vector<8x256xf32>
    %c8 = arith.constant 8 : index
    %c0_41 = arith.constant 0 : index
    %c0_42 = arith.constant 0 : index
    %64 = vector.load %arg9[%c8, %c0_41, %c0_42] : memref<9x256x256xf32, #tpu.memory_space<vmem>>, vector<1x256x256xf32>
    %65 = vector.shape_cast %64 : vector<1x256x256xf32> to vector<256x256xf32>
    %cst_43 = arith.constant dense<0.000000e+00> : vector<8x256xf32>
    %66 = tpu.matmul %63, %65, %cst_43 {dimension_numbers = #tpu.dot_dimension_numbers<[1], [0], [0], [1], [0, 0, 1, 1], [], []>} : vector<8x256xf32>, vector<256x256xf32>, vector<8x256xf32> -> vector<8x256xf32>
    %67 = arith.addf %62, %66 : vector<8x256xf32>
    %c0_44 = arith.constant 0 : index
    %c0_45 = arith.constant 0 : index
    %68 = vector.load %arg6[%c0_44, %c0_45] : memref<8x1xf32, #tpu.memory_space<vmem>>, vector<8x1xf32>
    %69 = vector.broadcast %68 : vector<8x1xf32> to vector<8x256xf32>
    %70 = arith.mulf %67, %69 : vector<8x256xf32>
    %c0_46 = arith.constant 0 : index
    %c0_47 = arith.constant 0 : index
    %71 = vector.load %arg7[%c0_46, %c0_47] : memref<8x1xf32, #tpu.memory_space<vmem>>, vector<8x1xf32>
    %72 = vector.broadcast %71 : vector<8x1xf32> to vector<8x256xf32>
    %73 = arith.addf %70, %72 : vector<8x256xf32>
    %cst_48 = arith.constant 0.000000e+00 : f32
    %74 = vector.broadcast %cst_48 : f32 to vector<8x256xf32>
    %75 = arith.cmpf oge, %73, %74 : vector<8x256xf32>
    %cst_49 = arith.constant 3.000000e-01 : f32
    %76 = vector.broadcast %cst_49 : f32 to vector<8x256xf32>
    %77 = arith.mulf %76, %73 : vector<8x256xf32>
    %78 = arith.select %75, %73, %77 : vector<8x256xi1>, vector<8x256xf32>
    %79 = arith.addf %78, %19 : vector<8x256xf32>
    %c0_50 = arith.constant 0 : index
    %c0_51 = arith.constant 0 : index
    %c0_52 = arith.constant 0 : index
    %80 = vector.load %arg10[%c0_50, %c0_51, %c0_52] : memref<1x8x256xf32, #tpu.memory_space<vmem>>, vector<1x8x256xf32>
    %81 = vector.shape_cast %80 : vector<1x8x256xf32> to vector<8x256xf32>
    %82 = vector.shape_cast %79 : vector<8x256xf32> to vector<1x8x256xf32>
    tpu.vector_store %arg10[%c0_50, %c0_51, %c0_52], %82 {strides = array<i32>} : memref<1x8x256xf32, #tpu.memory_space<vmem>>, vector<1x8x256xf32>,
    return
  }
  func.func @transform_0(%arg0: i32) -> (i32, i32, i32) {
    %c0_i32 = arith.constant 0 : i32
    %c0_i32_0 = arith.constant 0 : i32
    %c0_i32_1 = arith.constant 0 : i32
    return %arg0, %c0_i32, %c0_i32_0 : i32, i32, i32
  }
  func.func @transform_1(%arg0: i32) -> (i32, i32) {
    %c0_i32 = arith.constant 0 : i32
    %c0_i32_0 = arith.constant 0 : i32
    %c0_i32_1 = arith.constant 0 : i32
    return %c0_i32, %c0_i32_0 : i32, i32
  }
  func.func @transform_2(%arg0: i32) -> (i32, i32) {
    %c0_i32 = arith.constant 0 : i32
    %c0_i32_0 = arith.constant 0 : i32
    %c0_i32_1 = arith.constant 0 : i32
    return %c0_i32, %c0_i32_0 : i32, i32
  }
  func.func @transform_3(%arg0: i32) -> (i32, i32) {
    %c0_i32 = arith.constant 0 : i32
    %c0_i32_0 = arith.constant 0 : i32
    %c0_i32_1 = arith.constant 0 : i32
    return %c0_i32, %c0_i32_0 : i32, i32
  }
  func.func @transform_4(%arg0: i32) -> (i32, i32) {
    %c0_i32 = arith.constant 0 : i32
    %c0_i32_0 = arith.constant 0 : i32
    %c0_i32_1 = arith.constant 0 : i32
    return %c0_i32, %c0_i32_0 : i32, i32
  }
  func.func @transform_5(%arg0: i32) -> (i32, i32) {
    %c0_i32 = arith.constant 0 : i32
    %c0_i32_0 = arith.constant 0 : i32
    %c0_i32_1 = arith.constant 0 : i32
    return %c0_i32, %c0_i32_0 : i32, i32
  }
  func.func @transform_6(%arg0: i32) -> (i32, i32) {
    %c0_i32 = arith.constant 0 : i32
    %c0_i32_0 = arith.constant 0 : i32
    %c0_i32_1 = arith.constant 0 : i32
    return %c0_i32, %c0_i32_0 : i32, i32
  }
  func.func @transform_7(%arg0: i32) -> (i32, i32) {
    %c0_i32 = arith.constant 0 : i32
    %c0_i32_0 = arith.constant 0 : i32
    %c0_i32_1 = arith.constant 0 : i32
    return %c0_i32, %c0_i32_0 : i32, i32
  }
  func.func @transform_8(%arg0: i32) -> (i32, i32, i32) {
    %c0_i32 = arith.constant 0 : i32
    %c0_i32_0 = arith.constant 0 : i32
    %c0_i32_1 = arith.constant 0 : i32
    %c0_i32_2 = arith.constant 0 : i32
    return %c0_i32, %c0_i32_0, %c0_i32_1 : i32, i32, i32
  }
  func.func @transform_9(%arg0: i32) -> (i32, i32, i32) {
    %c0_i32 = arith.constant 0 : i32
    %c0_i32_0 = arith.constant 0 : i32
    %c0_i32_1 = arith.constant 0 : i32
    return %arg0, %c0_i32, %c0_i32_0 : i32, i32, i32
  }
}

</mosaic_0001>

<llo_original>
// kernel: residual_block.1
$region0: #{residual_block.1}
  #allocation0 [shape = 'u32[]', space=smem, size = 0x4, offset = 0x4, fixed_abs, tag = 'smem constant byte address 0x4 - core index']
  #allocation1 [shape = 'u32[144,128]{1,0:T(1,128)}', space=vmem, size = 0x12000, scoped, tag = 'internal scratch']
  %s0 = inlined_call_operand.vmem [shape: f32[2,36,256], index: 0, kind: input, shape index: {}]
  %s1 = inlined_call_operand.vmem [shape: f32[16,36], index: 1, kind: input, shape index: {}]
  %s2 = inlined_call_operand.vmem [shape: f32[8,1], index: 2, kind: input, shape index: {}]
  %s3 = inlined_call_operand.vmem [shape: f32[8,1], index: 3, kind: input, shape index: {}]
  %s4 = inlined_call_operand.hbm [shape: f32[72,8], index: 4, kind: input, shape index: {}]
  %s5 = inlined_call_operand.vmem [shape: f32[8,1], index: 5, kind: input, shape index: {}]
  %s6 = inlined_call_operand.vmem [shape: f32[8,1], index: 6, kind: input, shape index: {}]
  %s7 = inlined_call_operand.vmem [shape: f32[8,1], index: 7, kind: input, shape index: {}]
  %s8 = inlined_call_operand.hbm [shape: f32[9,256,256], index: 8, kind: input, shape index: {}]
  %s9 = inlined_call_operand.vmem [shape: f32[2,8,256], index: 9, kind: output, shape index: {}]
  %s10 = sld [smem:[#allocation0]]
  $region77: #{residual_block.1} parent=0
    _
  %s12 = ssub.s32 1, %s10
  %s13 = scalar_select 0, %s12, %s10
  $region1: #{residual_block.1} parent=0
    #allocation2 [shape = 'u8[36864]{0}', space=vmem, size = 0x9000, scoped, tag = 'input window, operand 4, single buffered']
    #allocation3 [shape = 's32[2]{0}', space=sflag, size = 0x8, scoped, tag = 'scoped memory for residual_block.1']
    #allocation4 [shape = 'u8[2359296]{0}', space=vmem, size = 0x240000, scoped, tag = 'input window, operand 8, single buffered']
    #allocation5 [shape = 's32[1]{0}', space=sflag, size = 0x4, scoped, tag = 'scoped memory for residual_block.1']
    %14 = vsyncpa [#allocation3], 0
    %15 = vsyncpa [#allocation5], 0
    loop: start=0, step=1, limit=4
    $region2: #{residual_block.1} parent=1 // loop_pre_header
      _
    $region3: #{residual_block.1} parent=1 // loop_header
      %s17 = sphi 0, %s21
      %p18 = scmp.ge.s32.totalorder %s17, 4
      %s27 = sphi 0, %s29
      %s30 = sphi 0, %s27
      %s31 = sphi 0, %s30
      %s47 = sphi 0, %s31
      %s51 = sphi 0, %s51
      %s53 = sphi 0, %s51
      %s54 = sphi 0, %s53
      %s68 = sphi 0, %s54
      %s72 = sphi 0, %s72
      %s74 = sphi 0, %s72
      %s75 = sphi 0, %s74
      %s89 = sphi 0, %s75
      %s93 = sphi 0, %s93
      %s95 = sphi 0, %s93
      %s96 = sphi 0, %s95
      %s110 = sphi 0, %s96
      %s114 = sphi 0, %s114
      %s116 = sphi 0, %s114
      %s117 = sphi 0, %s116
      %s131 = sphi 0, %s117
      %s135 = sphi 0, %s135
      %s137 = sphi 0, %s135
      %s138 = sphi 0, %s137
      %s152 = sphi 0, %s138
      %s156 = sphi 0, %s156
      %s158 = sphi 0, %s156
      %s159 = sphi 0, %s158
      %s173 = sphi 0, %s159
      %s177 = sphi 0, %s177
      %s179 = sphi 0, %s177
      %s180 = sphi 0, %s179
      %s194 = sphi 0, %s180
      %s198 = sphi 0, %s198
      %s200 = sphi 0, %s198
      %s201 = sphi 0, %s200
      %s215 = sphi 0, %s201
      %s221 = sphi 0, %s223
      %s224 = sphi 0, %s221
      %s225 = sphi 0, %s224
      %s241 = sphi 0, %s225
    $region4: #{residual_block.1} parent=1 // loop_header_branch
      %20 = sbr.rel (%p18) target = $region8
    $region5: #{residual_block.1} parent=1 // loop_body
      %s22 = ssub.s32 %s17, 1
      %s23 = ssub.s32 %s17, 2
      %s24 = sadd.s32 %s17, 1
      %s25 = ssub.s32 %s17, %s24
      %p26 = scmp.eq.s32.totalorder %s25, 0
      %s28 = sadd.s32 %s27, 1
      %s29 = scalar_select %p26, %s27, %s28
      %p32 = pneg %p26
      %p33 = scmp.eq.s32.totalorder %s17, 1
      %p34 = por %p32, %p33
      %p35 = scmp.ne.s32.totalorder %s27, %s30
      %p36 = scmp.eq.s32.totalorder %s17, 0
      %p37 = por %p35, %p36
      %p38 = scmp.ne.s32.totalorder %s27, %s30
      %p39 = scmp.eq.s32.totalorder %s22, 1
      %p40 = por %p38, %p39
      %p41 = scmp.ne.s32.totalorder %s30, %s31
      %p42 = scmp.eq.s32.totalorder %s22, 0
      %p43 = por %p41, %p42
      %p44 = scmp.ne.s32.totalorder %s30, %s31
      %p45 = scmp.eq.s32.totalorder %s23, 1
      %p46 = por %p44, %p45
      %p48 = scmp.ne.s32.totalorder %s31, %s47
      %p49 = scmp.eq.s32.totalorder %s23, 0
      %p50 = por %p48, %p49
      %s52 = sadd.s32 %s51, 1
      %p55 = scmp.eq.s32.totalorder %s17, 1
      %p56 = scmp.ne.s32.totalorder %s51, %s53
      %p57 = scmp.eq.s32.totalorder %s17, 0
      %p58 = por %p56, %p57
      %p59 = scmp.ne.s32.totalorder %s51, %s53
      %p60 = scmp.eq.s32.totalorder %s22, 1
      %p61 = por %p59, %p60
      %p62 = scmp.ne.s32.totalorder %s53, %s54
      %p63 = scmp.eq.s32.totalorder %s22, 0
      %p64 = por %p62, %p63
      %p65 = scmp.ne.s32.totalorder %s53, %s54
      %p66 = scmp.eq.s32.totalorder %s23, 1
      %p67 = por %p65, %p66
      %p69 = scmp.ne.s32.totalorder %s54, %s68
      %p70 = scmp.eq.s32.totalorder %s23, 0
      %p71 = por %p69, %p70
      %s73 = sadd.s32 %s72, 1
      %p76 = scmp.eq.s32.totalorder %s17, 1
      %p77 = scmp.ne.s32.totalorder %s72, %s74
      %p78 = scmp.eq.s32.totalorder %s17, 0
      %p79 = por %p77, %p78
      %p80 = scmp.ne.s32.totalorder %s72, %s74
      %p81 = scmp.eq.s32.totalorder %s22, 1
      %p82 = por %p80, %p81
      %p83 = scmp.ne.s32.totalorder %s74, %s75
      %p84 = scmp.eq.s32.totalorder %s22, 0
      %p85 = por %p83, %p84
      %p86 = scmp.ne.s32.totalorder %s74, %s75
      %p87 = scmp.eq.s32.totalorder %s23, 1
      %p88 = por %p86, %p87
      %p90 = scmp.ne.s32.totalorder %s75, %s89
      %p91 = scmp.eq.s32.totalorder %s23, 0
      %p92 = por %p90, %p91
      %s94 = sadd.s32 %s93, 1
      %p97 = scmp.eq.s32.totalorder %s17, 1
      %p98 = scmp.ne.s32.totalorder %s93, %s95
      %p99 = scmp.eq.s32.totalorder %s17, 0
      %p100 = por %p98, %p99
      %p101 = scmp.ne.s32.totalorder %s93, %s95
      %p102 = scmp.eq.s32.totalorder %s22, 1
      %p103 = por %p101, %p102
      %p104 = scmp.ne.s32.totalorder %s95, %s96
      %p105 = scmp.eq.s32.totalorder %s22, 0
      %p106 = por %p104, %p105
      %p107 = scmp.ne.s32.totalorder %s95, %s96
      %p108 = scmp.eq.s32.totalorder %s23, 1
      %p109 = por %p107, %p108
      %p111 = scmp.ne.s32.totalorder %s96, %s110
      %p112 = scmp.eq.s32.totalorder %s23, 0
      %p113 = por %p111, %p112
      %s115 = sadd.s32 %s114, 1
      %p118 = scmp.eq.s32.totalorder %s17, 1
      %p119 = scmp.ne.s32.totalorder %s114, %s116
      %p120 = scmp.eq.s32.totalorder %s17, 0
      %p121 = por %p119, %p120
      %p122 = scmp.ne.s32.totalorder %s114, %s116
      %p123 = scmp.eq.s32.totalorder %s22, 1
      %p124 = por %p122, %p123
      %p125 = scmp.ne.s32.totalorder %s116, %s117
      %p126 = scmp.eq.s32.totalorder %s22, 0
      %p127 = por %p125, %p126
      %p128 = scmp.ne.s32.totalorder %s116, %s117
      %p129 = scmp.eq.s32.totalorder %s23, 1
      %p130 = por %p128, %p129
      %p132 = scmp.ne.s32.totalorder %s117, %s131
      %p133 = scmp.eq.s32.totalorder %s23, 0
      %p134 = por %p132, %p133
      %s136 = sadd.s32 %s135, 1
      %p139 = scmp.eq.s32.totalorder %s17, 1
      %p140 = scmp.ne.s32.totalorder %s135, %s137
      %p141 = scmp.eq.s32.totalorder %s17, 0
      %p142 = por %p140, %p141
      %p143 = scmp.ne.s32.totalorder %s135, %s137
      %p144 = scmp.eq.s32.totalorder %s22, 1
      %p145 = por %p143, %p144
      %p146 = scmp.ne.s32.totalorder %s137, %s138
      %p147 = scmp.eq.s32.totalorder %s22, 0
      %p148 = por %p146, %p147
      %p149 = scmp.ne.s32.totalorder %s137, %s138
      %p150 = scmp.eq.s32.totalorder %s23, 1
      %p151 = por %p149, %p150
      %p153 = scmp.ne.s32.totalorder %s138, %s152
      %p154 = scmp.eq.s32.totalorder %s23, 0
      %p155 = por %p153, %p154
      %s157 = sadd.s32 %s156, 1
      %p160 = scmp.eq.s32.totalorder %s17, 1
      %p161 = scmp.ne.s32.totalorder %s156, %s158
      %p162 = scmp.eq.s32.totalorder %s17, 0
      %p163 = por %p161, %p162
      %p164 = scmp.ne.s32.totalorder %s156, %s158
      %p165 = scmp.eq.s32.totalorder %s22, 1
      %p166 = por %p164, %p165
      %p167 = scmp.ne.s32.totalorder %s158, %s159
      %p168 = scmp.eq.s32.totalorder %s22, 0
      %p169 = por %p167, %p168
      %p170 = scmp.ne.s32.totalorder %s158, %s159
      %p171 = scmp.eq.s32.totalorder %s23, 1
      %p172 = por %p170, %p171
      %p174 = scmp.ne.s32.totalorder %s159, %s173
      %p175 = scmp.eq.s32.totalorder %s23, 0
      %p176 = por %p174, %p175
      %s178 = sadd.s32 %s177, 1
      %p181 = scmp.eq.s32.totalorder %s17, 1
      %p182 = scmp.ne.s32.totalorder %s177, %s179
      %p183 = scmp.eq.s32.totalorder %s17, 0
      %p184 = por %p182, %p183
      %p185 = scmp.ne.s32.totalorder %s177, %s179
      %p186 = scmp.eq.s32.totalorder %s22, 1
      %p187 = por %p185, %p186
      %p188 = scmp.ne.s32.totalorder %s179, %s180
      %p189 = scmp.eq.s32.totalorder %s22, 0
      %p190 = por %p188, %p189
      %p191 = scmp.ne.s32.totalorder %s179, %s180
      %p192 = scmp.eq.s32.totalorder %s23, 1
      %p193 = por %p191, %p192
      %p195 = scmp.ne.s32.totalorder %s180, %s194
      %p196 = scmp.eq.s32.totalorder %s23, 0
      %p197 = por %p195, %p196
      %s199 = sadd.s32 %s198, 1
      %p202 = scmp.eq.s32.totalorder %s17, 1
      %p203 = scmp.ne.s32.totalorder %s198, %s200
      %p204 = scmp.eq.s32.totalorder %s17, 0
      %p205 = por %p203, %p204
      %p206 = scmp.ne.s32.totalorder %s198, %s200
      %p207 = scmp.eq.s32.totalorder %s22, 1
      %p208 = por %p206, %p207
      %p209 = scmp.ne.s32.totalorder %s200, %s201
      %p210 = scmp.eq.s32.totalorder %s22, 0
      %p211 = por %p209, %p210
      %p212 = scmp.ne.s32.totalorder %s200, %s201
      %p213 = scmp.eq.s32.totalorder %s23, 1
      %p214 = por %p212, %p213
      %p216 = scmp.ne.s32.totalorder %s201, %s215
      %p217 = scmp.eq.s32.totalorder %s23, 0
      %p218 = por %p216, %p217
      %s219 = ssub.s32 %s17, %s24
      %p220 = scmp.eq.s32.totalorder %s219, 0
      %s222 = sadd.s32 %s221, 1
      %s223 = scalar_select %p220, %s221, %s222
      %p226 = pneg %p220
      %p227 = scmp.eq.s32.totalorder %s17, 1
      %p228 = por %p226, %p227
      %p229 = scmp.ne.s32.totalorder %s221, %s224
      %p230 = scmp.eq.s32.totalorder %s17, 0
      %p231 = por %p229, %p230
      %p232 = scmp.ne.s32.totalorder %s221, %s224
      %p233 = scmp.eq.s32.totalorder %s22, 1
      %p234 = por %p232, %p233
      %p235 = scmp.ne.s32.totalorder %s224, %s225
      %p236 = scmp.eq.s32.totalorder %s22, 0
      %p237 = por %p235, %p236
      %p238 = scmp.ne.s32.totalorder %s224, %s225
      %p239 = scmp.eq.s32.totalorder %s23, 1
      %p240 = por %p238, %p239
      %p242 = scmp.ne.s32.totalorder %s225, %s241
      %p243 = scmp.eq.s32.totalorder %s23, 0
      %p244 = por %p242, %p243
      %p245 = scmp.le.s32.totalorder 1, %s17
      %p246 = scmp.lt.s32.totalorder %s17, 3
      %p247 = pnand %p245, %p246
      %p248 = pneg %p247
      // Predicated region
      $region9: #{residual_block.1} parent=5 // pred_check
        _
      $region10: #{residual_block.1} parent=5 // pred_check_branch
        %250 = sbr.rel (%p247) target = $region12
      $region11: #{residual_block.1} parent=5 // pred_region
        %s251 = ssub.s32 %s17, 1
        // Predicated region
        $region13: #{residual_block.1} parent=11 // pred_check
          %p252 = pneg %p64
        $region14: #{residual_block.1} parent=11 // pred_check_branch
          %254 = sbr.rel (%p252) target = $region16
        $region15: #{residual_block.1} parent=11 // pred_region
          _
        $region16: #{residual_block.1} parent=11 // pred_fallthru
          _
        // Predicated region
        $region17: #{residual_block.1} parent=11 // pred_check
          %p255 = pneg %p85
        $region18: #{residual_block.1} parent=11 // pred_check_branch
          %257 = sbr.rel (%p255) target = $region20
        $region19: #{residual_block.1} parent=11 // pred_region
          _
        $region20: #{residual_block.1} parent=11 // pred_fallthru
          _
        // Predicated region
        $region21: #{residual_block.1} parent=11 // pred_check
          %p258 = pneg %p106
        $region22: #{residual_block.1} parent=11 // pred_check_branch
          %260 = sbr.rel (%p258) target = $region24
        $region23: #{residual_block.1} parent=11 // pred_region
          _
        $region24: #{residual_block.1} parent=11 // pred_fallthru
          _
        // Predicated region
        $region25: #{residual_block.1} parent=11 // pred_check
          %p261 = pneg %p127
        $region26: #{residual_block.1} parent=11 // pred_check_branch
          %263 = sbr.rel (%p261) target = $region28
        $region27: #{residual_block.1} parent=11 // pred_region
          %s265 = ssub.s32 1152, 1152
          %266 = vsyncadd [#allocation3], %s265
          %s267 = sshll.u32 [#allocation2], 4
          %s268 = int_to_ptr.vmem [resolvable:$true] %s267
          %273 = dma.hbm_to_vmem [thread:$0]  %s4, 1152, %s268, [#allocation3], 128, 128, 8
        $region28: #{residual_block.1} parent=11 // pred_fallthru
          _
        // Predicated region
        $region29: #{residual_block.1} parent=11 // pred_check
          %p274 = pneg %p148
        $region30: #{residual_block.1} parent=11 // pred_check_branch
          %276 = sbr.rel (%p274) target = $region32
        $region31: #{residual_block.1} parent=11 // pred_region
          _
        $region32: #{residual_block.1} parent=11 // pred_fallthru
          _
        // Predicated region
        $region33: #{residual_block.1} parent=11 // pred_check
          %p277 = pneg %p169
        $region34: #{residual_block.1} parent=11 // pred_check_branch
          %279 = sbr.rel (%p277) target = $region36
        $region35: #{residual_block.1} parent=11 // pred_region
          _
        $region36: #{residual_block.1} parent=11 // pred_fallthru
          _
        // Predicated region
        $region37: #{residual_block.1} parent=11 // pred_check
          %p280 = pneg %p190
        $region38: #{residual_block.1} parent=11 // pred_check_branch
          %282 = sbr.rel (%p280) target = $region40
        $region39: #{residual_block.1} parent=11 // pred_region
          _
        $region40: #{residual_block.1} parent=11 // pred_fallthru
          _
        // Predicated region
        $region41: #{residual_block.1} parent=11 // pred_check
          %p283 = pneg %p211
        $region42: #{residual_block.1} parent=11 // pred_check_branch
          %285 = sbr.rel (%p283) target = $region44
        $region43: #{residual_block.1} parent=11 // pred_region
          %s287 = ssub.s32 73728, 73728
          %288 = vsyncadd [#allocation5], %s287
          %s289 = sshll.u32 [#allocation4], 4
          %s290 = int_to_ptr.vmem [resolvable:$true] %s289
          %295 = dma.hbm_to_vmem [thread:$0]  %s8, 73728, %s290, [#allocation5], 256, 256, 16
        $region44: #{residual_block.1} parent=11 // pred_fallthru
          _
      $region12: #{residual_block.1} parent=5 // pred_fallthru
        _
      %p296 = scmp.lt.s32.totalorder %s17, 2
      // Predicated region
      $region45: #{residual_block.1} parent=5 // pred_check
        %p297 = pneg %p296
      $region46: #{residual_block.1} parent=5 // pred_check_branch
        %299 = sbr.rel (%p297) target = $region48
      $region47: #{residual_block.1} parent=5 // pred_region
        // Predicated region
        $region49: #{residual_block.1} parent=47 // pred_check
          %p300 = pneg %p37
        $region50: #{residual_block.1} parent=47 // pred_check_branch
          %302 = sbr.rel (%p300) target = $region52
        $region51: #{residual_block.1} parent=47 // pred_region
          %p303 = scmp.lt.s32.totalorder %s17, 1
          %s304 = scalar_select %p303, %s17, 1
          %s305 = smul.addr %s304, 10
          %s306 = smul.addr %s305, 8
          %s307 = scalar_lea.vmem %s0, %s306
        $region52: #{residual_block.1} parent=47 // pred_fallthru
          _
      $region48: #{residual_block.1} parent=5 // pred_fallthru
        _
      %p308 = scmp.le.s32.totalorder 1, %s17
      %p309 = scmp.lt.s32.totalorder %s17, 3
      %p310 = pnand %p308, %p309
      %p311 = pneg %p310
      // Predicated region
      $region53: #{residual_block.1} parent=5 // pred_check
        _
      $region54: #{residual_block.1} parent=5 // pred_check_branch
        %313 = sbr.rel (%p310) target = $region56
      $region55: #{residual_block.1} parent=5 // pred_region
        %s314 = ssub.s32 %s17, 1
        // Predicated region
        $region57: #{residual_block.1} parent=55 // pred_check
          %p315 = pneg %p127
        $region58: #{residual_block.1} parent=55 // pred_check_branch
          %317 = sbr.rel (%p315) target = $region60
        $region59: #{residual_block.1} parent=55 // pred_region
          %318 = dma.done [#allocation3], 1152
        $region60: #{residual_block.1} parent=55 // pred_fallthru
          _
        // Predicated region
        $region61: #{residual_block.1} parent=55 // pred_check
          %p319 = pneg %p211
        $region62: #{residual_block.1} parent=55 // pred_check_branch
          %321 = sbr.rel (%p319) target = $region64
        $region63: #{residual_block.1} parent=55 // pred_region
          %322 = dma.done [#allocation5], 73728
        $region64: #{residual_block.1} parent=55 // pred_fallthru
          _
        %p323 = scmp.lt.s32.totalorder %s22, 1
        %s324 = scalar_select %p323, %s22, 1
        %s325 = smul.addr %s324, 10
        %s326 = smul.addr %s325, 8
        %s327 = scalar_lea.vmem %s0, %s326
        %p328 = pneg %p43
        %p329 = pneg %p40
        %p330 = pneg %p64
        %p331 = pneg %p61
        %p332 = pneg %p85
        %p333 = pneg %p82
        %p334 = pneg %p106
        %p335 = pneg %p103
        %p336 = pneg %p127
        %p337 = pneg %p124
        %p338 = pneg %p148
        %p339 = pneg %p145
        %p340 = pneg %p169
        %p341 = pneg %p166
        %p342 = pneg %p190
        %p343 = pneg %p187
        %p344 = pneg %p211
        %p345 = pneg %p208
        %p346 = pneg %p237
        %p347 = pneg %p234
        %p348 = scmp.lt.s32.totalorder %s22, 1
        %s349 = scalar_select %p348, %s22, 1
        %s350 = smul.addr %s349, 2
        %s351 = smul.addr %s350, 8
        %s352 = scalar_lea.vmem %s9, %s351
        %p353 = scmp.lt.s32.totalorder %s22, 1
        %s354 = scalar_select %p353, %s22, 1
        %s355 = smul.addr %s354, 10
        %s356 = smul.addr %s355, 8
        %s357 = scalar_lea.vmem %s0, %s356
        %p358 = scmp.lt.s32.totalorder %s22, 1
        %s359 = scalar_select %p358, %s22, 1
        %s360 = smul.addr %s359, 2
        %s361 = smul.addr %s360, 8
        %s362 = scalar_lea.vmem %s9, %s361
        %v363 = vld [vmem:[%s357] sm:$0xff]
        %v364 = vld [vmem:[%s357 + $0x8] sm:$0xff]
        %v365 = vld [vmem:[%s357 + $0x10] sm:$0xff]
        %v366 = vld [vmem:[%s357 + $0x18] sm:$0xff]
        %v367 = vld [vmem:[%s357 + $0x20] sm:$0xff]
        %v368 = vld [vmem:[%s357 + $0x28] sm:$0xff]
        %v369 = vld [vmem:[%s357 + $0x30] sm:$0xff]
        %v370 = vld [vmem:[%s357 + $0x38] sm:$0xff]
        %v371 = vld [vmem:[%s357 + $0x40] sm:$0xf]
        %v372 = vld [vmem:[%s357 + $0x48] sm:$0xf]
        %v373 = vld [vmem:[%s1] sm:$0xff]
        %v374 = vld [vmem:[%s1 + $0x8] sm:$0xff]
        %vm375 = vcmask 293888
        %v377 = vsel %vm375, %v373, 0
        %v380 = vsel %vm375, %v374, 0
        %vm382 = vcmask 1043456
        %v384 = vsel %vm382, %v371, 0
        %v387 = vsel %vm382, %v372, 0
        %389 = vmatprep.subr.mxu0 %v364
        %390 = vmatpush1.msra.mxu0 %v363
        %391 = vmatprep.subr.mxu0 %v366
        %392 = vmatpush1.msra.mxu0 %v365
        %393 = vmatprep.subr.mxu0 %v368
        %394 = vmatpush1.msra.mxu0 %v367
        %395 = vmatprep.subr.mxu0 %v370
        %396 = vmatpush1.msra.mxu0 %v369
        %397 = vmatprep.subr.mxu0 %v387
        %398 = vmatpush1.msra.mxu0 %v384
        %399 = vmatprep.subr.mxu0 0.0
        %400 = vmatpush1.msra.mxu0 0.0
        %401 = vmatprep.subr.mxu0 0.0
        %402 = vmatpush1.msra.mxu0 0.0
        %403 = vmatprep.subr.mxu0 0.0
        %404 = vmatpush1.msra.mxu0 0.0
        %405 = vmatprep.subr.mxu0 0.0
        %406 = vmatpush1.msra.mxu0 0.0
        %407 = vmatprep.subr.mxu0 0.0
        %408 = vmatpush1.msra.mxu0 0.0
        %409 = vmatprep.subr.mxu0 0.0
        %410 = vmatpush1.msra.mxu0 0.0
        %411 = vmatprep.subr.mxu0 0.0
        %412 = vmatpush1.msra.mxu0 0.0
        %413 = vmatprep.subr.mxu0 0.0
        %414 = vmatpush1.msra.mxu0 0.0
        %415 = vmatprep.subr.mxu0 0.0
        %416 = vmatpush1.msra.mxu0 0.0
        %417 = vmatprep.subr.mxu0 0.0
        %418 = vmatpush1.msra.mxu0 0.0
        %419 = vmatprep.subr.mxu0 0.0
        %420 = vmatpush1.msra.mxu0 0.0
        %421 = vmatprep.subr.mxu0 0.0
        %422 = vmatpush1.msra.mxu0 0.0
        %423 = vmatprep.subr.mxu0 0.0
        %424 = vmatpush1.msra.mxu0 0.0
        %425 = vmatprep.subr.mxu0 0.0
        %426 = vmatpush1.msra.mxu0 0.0
        %427 = vmatprep.subr.mxu0 0.0
        %428 = vmatpush1.msra.mxu0 0.0
        %429 = vmatprep.subr.mxu0 0.0
        %430 = vmatpush1.msra.mxu0 0.0
        %431 = vmatprep.subr.mxu0 0.0
        %432 = vmatpush1.msra.mxu0 0.0
        %433 = vmatprep.subr.mxu0 0.0
        %434 = vmatpush1.msra.mxu0 0.0
        %435 = vmatprep.subr.mxu0 0.0
        %436 = vmatpush1.msra.mxu0 0.0
        %437 = vmatprep.subr.mxu0 0.0
        %438 = vmatpush1.msra.mxu0 0.0
        %439 = vmatprep.subr.mxu0 0.0
        %440 = vmatpush1.msra.mxu0 0.0
        %441 = vmatprep.subr.mxu0 0.0
        %442 = vmatpush1.msra.mxu0 0.0
        %443 = vmatprep.subr.mxu0 0.0
        %444 = vmatpush1.msra.mxu0 0.0
        %445 = vmatprep.subr.mxu0 0.0
        %446 = vmatpush1.msra.mxu0 0.0
        %447 = vmatprep.subr.mxu0 0.0
        %448 = vmatpush1.msra.mxu0 0.0
        %449 = vmatprep.subr.mxu0 0.0
        %450 = vmatpush1.msra.mxu0 0.0
        %451 = vmatprep.subr.mxu0 0.0
        %452 = vmatpush1.msra.mxu0 0.0
        %453 = vmatprep.mubr.f32.mxu0 0.0
        %454 = vmatmul.mubr.f32.gmra.mrb[0].mxu0 %v377
        %v455 = vpop.f32.mrb[0].mxu0
        %v456 = vadd.f32 0.0, %v455
        %v457 = vpop.f32.mrb[0].mxu0
        %v458 = vadd.f32 0.0, %v457
        %459 = vmatprep.mubr.f32.mxu0 0.0
        %460 = vmatmul.mubr.f32.gmra.mrb[0].mxu0 %v380
        %v461 = vpop.f32.mrb[0].mxu0
        %v462 = vadd.f32 0.0, %v461
        %v463 = vpop.f32.mrb[0].mxu0
        %v464 = vadd.f32 0.0, %v463
        %465 = vdwg.mxu0
        %v466 = vld [vmem:[%s2] sm:$0xff]
        %468 = vset.pattern.permute.xlu0 0
        %469 = vperm.xlu0 %468, %v466
        %v470 = vpop.permute.xlu0 %469
        %v472 = vmul.f32 %v456, %v470
        %v473 = vmul.f32 %v458, %v470
        %v474 = vld [vmem:[%s3] sm:$0xff]
        %476 = vset.pattern.permute.xlu0 0
        %477 = vperm.xlu0 %476, %v474
        %v478 = vpop.permute.xlu0 %477
        %v480 = vadd.f32 %v472, %v478
        %v481 = vadd.f32 %v473, %v478
        %vm482 = vcmp.ge.f32.partialorder %v480, 0.0
        %vm483 = vcmp.ge.f32.partialorder %v481, 0.0
        %v484 = vmul.f32 %v480, 0.3
        %v485 = vmul.f32 %v481, 0.3
        %v486 = vsel %vm482, %v480, %v484
        %v487 = vsel %vm483, %v481, %v485
        %v488 = vld [vmem:[%s7] sm:$0xff]
        %490 = vset.pattern.permute.xlu0 0
        %491 = vperm.xlu0 %490, %v488
        %v492 = vpop.permute.xlu0 %491
        %v494 = vadd.f32 %v462, %v492
        %v495 = vadd.f32 %v464, %v492
        %v496 = vld [vmem:[#allocation2] sm:$0xff]
        %v497 = vld [vmem:[#allocation2 + $0x8] sm:$0xff]
        %v498 = vld [vmem:[#allocation2 + $0x10] sm:$0xff]
        %v499 = vld [vmem:[#allocation2 + $0x18] sm:$0xff]
        %v500 = vld [vmem:[#allocation2 + $0x20] sm:$0xff]
        %v501 = vld [vmem:[#allocation2 + $0x28] sm:$0xff]
        %v502 = vld [vmem:[#allocation2 + $0x30] sm:$0xff]
        %v503 = vld [vmem:[#allocation2 + $0x38] sm:$0xff]
        %v504 = vld [vmem:[#allocation2 + $0x40] sm:$0xff]
        %vm505 = vcmask 64512
        %v507 = vsel %vm505, %v496, 0
        %v510 = vsel %vm505, %v497, 0
        %v513 = vsel %vm505, %v498, 0
        %v516 = vsel %vm505, %v499, 0
        %v519 = vsel %vm505, %v500, 0
        %v522 = vsel %vm505, %v501, 0
        %v525 = vsel %vm505, %v502, 0
        %v528 = vsel %vm505, %v503, 0
        %v531 = vsel %vm505, %v504, 0
        %533 = vmatprep.subr.mxu0 %v487
        %534 = vmatpush1.msra.mxu0 %v486
        %535 = vmatprep.subr.mxu0 0.0
        %536 = vmatpush1.msra.mxu0 0.0
        %537 = vmatprep.subr.mxu0 0.0
        %538 = vmatpush1.msra.mxu0 0.0
        %539 = vmatprep.subr.mxu0 0.0
        %540 = vmatpush1.msra.mxu0 0.0
        %541 = vmatprep.subr.mxu0 0.0
        %542 = vmatpush1.msra.mxu0 0.0
        %543 = vmatprep.subr.mxu0 0.0
        %544 = vmatpush1.msra.mxu0 0.0
        %545 = vmatprep.subr.mxu0 0.0
        %546 = vmatpush1.msra.mxu0 0.0
        %547 = vmatprep.subr.mxu0 0.0
        %548 = vmatpush1.msra.mxu0 0.0
        %549 = vmatprep.subr.mxu0 0.0
        %550 = vmatpush1.msra.mxu0 0.0
        %551 = vmatprep.subr.mxu0 0.0
        %552 = vmatpush1.msra.mxu0 0.0
        %553 = vmatprep.subr.mxu0 0.0
        %554 = vmatpush1.msra.mxu0 0.0
        %555 = vmatprep.subr.mxu0 0.0
        %556 = vmatpush1.msra.mxu0 0.0
        %557 = vmatprep.subr.mxu0 0.0
        %558 = vmatpush1.msra.mxu0 0.0
        %559 = vmatprep.subr.mxu0 0.0
        %560 = vmatpush1.msra.mxu0 0.0
        %561 = vmatprep.subr.mxu0 0.0
        %562 = vmatpush1.msra.mxu0 0.0
        %563 = vmatprep.subr.mxu0 0.0
        %564 = vmatpush1.msra.mxu0 0.0
        %565 = vmatprep.subr.mxu0 0.0
        %566 = vmatpush1.msra.mxu0 0.0
        %567 = vmatprep.subr.mxu0 0.0
        %568 = vmatpush1.msra.mxu0 0.0
        %569 = vmatprep.subr.mxu0 0.0
        %570 = vmatpush1.msra.mxu0 0.0
        %571 = vmatprep.subr.mxu0 0.0
        %572 = vmatpush1.msra.mxu0 0.0
        %573 = vmatprep.subr.mxu0 0.0
        %574 = vmatpush1.msra.mxu0 0.0
        %575 = vmatprep.subr.mxu0 0.0
        %576 = vmatpush1.msra.mxu0 0.0
        %577 = vmatprep.subr.mxu0 0.0
        %578 = vmatpush1.msra.mxu0 0.0
        %579 = vmatprep.subr.mxu0 0.0
        %580 = vmatpush1.msra.mxu0 0.0
        %581 = vmatprep.subr.mxu0 0.0
        %582 = vmatpush1.msra.mxu0 0.0
        %583 = vmatprep.subr.mxu0 0.0
        %584 = vmatpush1.msra.mxu0 0.0
        %585 = vmatprep.subr.mxu0 0.0
        %586 = vmatpush1.msra.mxu0 0.0
        %587 = vmatprep.subr.mxu0 0.0
        %588 = vmatpush1.msra.mxu0 0.0
        %589 = vmatprep.subr.mxu0 0.0
        %590 = vmatpush1.msra.mxu0 0.0
        %591 = vmatprep.subr.mxu0 0.0
        %592 = vmatpush1.msra.mxu0 0.0
        %593 = vmatprep.subr.mxu0 0.0
        %594 = vmatpush1.msra.mxu0 0.0
        %595 = vmatprep.subr.mxu0 0.0
        %596 = vmatpush1.msra.mxu0 0.0
        %597 = vmatprep.mubr.f32.mxu0 0.0
        %598 = vmatmul.mubr.f32.gmra.mrb[0].mxu0 %v507
        %v599 = vpop.f32.mrb[0].mxu0
        %v600 = vadd.f32 0.0, %v599
        %v601 = vpop.f32.mrb[0].mxu0
        %v602 = vadd.f32 0.0, %v601
        %603 = vmatprep.mubr.f32.mxu0 0.0
        %604 = vmatmul.mubr.f32.gmra.mrb[0].mxu0 %v510
        %v605 = vpop.f32.mrb[0].mxu0
        %v606 = vadd.f32 0.0, %v605
        %v607 = vpop.f32.mrb[0].mxu0
        %v608 = vadd.f32 0.0, %v607
        %609 = vmatprep.mubr.f32.mxu0 0.0
        %610 = vmatmul.mubr.f32.gmra.mrb[0].mxu0 %v513
        %v611 = vpop.f32.mrb[0].mxu0
        %v612 = vadd.f32 0.0, %v611
        %v613 = vpop.f32.mrb[0].mxu0
        %v614 = vadd.f32 0.0, %v613
        %615 = vmatprep.mubr.f32.mxu0 0.0
        %616 = vmatmul.mubr.f32.gmra.mrb[0].mxu0 %v516
        %v617 = vpop.f32.mrb[0].mxu0
        %v618 = vadd.f32 0.0, %v617
        %v619 = vpop.f32.mrb[0].mxu0
        %v620 = vadd.f32 0.0, %v619
        %621 = vmatprep.mubr.f32.mxu0 0.0
        %622 = vmatmul.mubr.f32.gmra.mrb[0].mxu0 %v519
        %v623 = vpop.f32.mrb[0].mxu0
        %v624 = vadd.f32 0.0, %v623
        %v625 = vpop.f32.mrb[0].mxu0
        %v626 = vadd.f32 0.0, %v625
        %627 = vmatprep.mubr.f32.mxu0 0.0
        %628 = vmatmul.mubr.f32.gmra.mrb[0].mxu0 %v522
        %v629 = vpop.f32.mrb[0].mxu0
        %v630 = vadd.f32 0.0, %v629
        %v631 = vpop.f32.mrb[0].mxu0
        %v632 = vadd.f32 0.0, %v631
        %633 = vmatprep.mubr.f32.mxu0 0.0
        %634 = vmatmul.mubr.f32.gmra.mrb[0].mxu0 %v525
        %v635 = vpop.f32.mrb[0].mxu0
        %v636 = vadd.f32 0.0, %v635
        %v637 = vpop.f32.mrb[0].mxu0
        %v638 = vadd.f32 0.0, %v637
        %639 = vmatprep.mubr.f32.mxu0 0.0
        %640 = vmatmul.mubr.f32.gmra.mrb[0].mxu0 %v528
        %v641 = vpop.f32.mrb[0].mxu0
        %v642 = vadd.f32 0.0, %v641
        %v643 = vpop.f32.mrb[0].mxu0
        %v644 = vadd.f32 0.0, %v643
        %645 = vmatprep.mubr.f32.mxu0 0.0
        %646 = vmatmul.mubr.f32.gmra.mrb[0].mxu0 %v531
        %v647 = vpop.f32.mrb[0].mxu0
        %v648 = vadd.f32 0.0, %v647
        %v649 = vpop.f32.mrb[0].mxu0
        %v650 = vadd.f32 0.0, %v649
        %651 = vdwg.mxu0
        %v652 = vld [vmem:[#allocation4] sm:$0xff]
        %v653 = vld [vmem:[#allocation4 + $0x8] sm:$0xff]
        %v654 = vld [vmem:[#allocation4 + $0x10] sm:$0xff]
        %v655 = vld [vmem:[#allocation4 + $0x18] sm:$0xff]
        %v656 = vld [vmem:[#allocation4 + $0x20] sm:$0xff]
        %v657 = vld [vmem:[#allocation4 + $0x28] sm:$0xff]
        %v658 = vld [vmem:[#allocation4 + $0x30] sm:$0xff]
        %v659 = vld [vmem:[#allocation4 + $0x38] sm:$0xff]
        %v660 = vld [vmem:[#allocation4 + $0x40] sm:$0xff]
        %v661 = vld [vmem:[#allocation4 + $0x48] sm:$0xff]
        %v662 = vld [vmem:[#allocation4 + $0x50] sm:$0xff]
        %v663 = vld [vmem:[#allocation4 + $0x58] sm:$0xff]
        %v664 = vld [vmem:[#allocation4 + $0x60] sm:$0xff]
        %v665 = vld [vmem:[#allocation4 + $0x68] sm:$0xff]
        %v666 = vld [vmem:[#allocation4 + $0x70] sm:$0xff]
        %v667 = vld [vmem:[#allocation4 + $0x78] sm:$0xff]
        %v668 = vld [vmem:[#allocation4 + $0x80] sm:$0xff]
        %v669 = vld [vmem:[#allocation4 + $0x88] sm:$0xff]
        %v670 = vld [vmem:[#allocation4 + $0x90] sm:$0xff]
        %v671 = vld [vmem:[#allocation4 + $0x98] sm:$0xff]
        %v672 = vld [vmem:[#allocation4 + $0xa0] sm:$0xff]
        %v673 = vld [vmem:[#allocation4 + $0xa8] sm:$0xff]
        %v674 = vld [vmem:[#allocation4 + $0xb0] sm:$0xff]
        %v675 = vld [vmem:[#allocation4 + $0xb8] sm:$0xff]
        %v676 = vld [vmem:[#allocation4 + $0xc0] sm:$0xff]
        %v677 = vld [vmem:[#allocation4 + $0xc8] sm:$0xff]
        %v678 = vld [vmem:[#allocation4 + $0xd0] sm:$0xff]
        %v679 = vld [vmem:[#allocation4 + $0xd8] sm:$0xff]
        %v680 = vld [vmem:[#allocation4 + $0xe0] sm:$0xff]
        %v681 = vld [vmem:[#allocation4 + $0xe8] sm:$0xff]
        %v682 = vld [vmem:[#allocation4 + $0xf0] sm:$0xff]
        %v683 = vld [vmem:[#allocation4 + $0xf8] sm:$0xff]
        %v684 = vld [vmem:[#allocation4 + $0x100] sm:$0xff]
        %v685 = vld [vmem:[#allocation4 + $0x108] sm:$0xff]
        %v686 = vld [vmem:[#allocation4 + $0x110] sm:$0xff]
        %v687 = vld [vmem:[#allocation4 + $0x118] sm:$0xff]
        %v688 = vld [vmem:[#allocation4 + $0x120] sm:$0xff]
        %v689 = vld [vmem:[#allocation4 + $0x128] sm:$0xff]
        %v690 = vld [vmem:[#allocation4 + $0x130] sm:$0xff]
        %v691 = vld [vmem:[#allocation4 + $0x138] sm:$0xff]
        %v692 = vld [vmem:[#allocation4 + $0x140] sm:$0xff]
        %v693 = vld [vmem:[#allocation4 + $0x148] sm:$0xff]
        %v694 = vld [vmem:[#allocation4 + $0x150] sm:$0xff]
        %v695 = vld [vmem:[#allocation4 + $0x158] sm:$0xff]
        %v696 = vld [vmem:[#allocation4 + $0x160] sm:$0xff]
        %v697 = vld [vmem:[#allocation4 + $0x168] sm:$0xff]
        %v698 = vld [vmem:[#allocation4 + $0x170] sm:$0xff]
        %v699 = vld [vmem:[#allocation4 + $0x178] sm:$0xff]
        %v700 = vld [vmem:[#allocation4 + $0x180] sm:$0xff]
        %v701 = vld [vmem:[#allocation4 + $0x188] sm:$0xff]
        %v702 = vld [vmem:[#allocation4 + $0x190] sm:$0xff]
        %v703 = vld [vmem:[#allocation4 + $0x198] sm:$0xff]
        %v704 = vld [vmem:[#allocation4 + $0x1a0] sm:$0xff]
        %v705 = vld [vmem:[#allocation4 + $0x1a8] sm:$0xff]
        %v706 = vld [vmem:[#allocation4 + $0x1b0] sm:$0xff]
        %v707 = vld [vmem:[#allocation4 + $0x1b8] sm:$0xff]
        %v708 = vld [vmem:[#allocation4 + $0x1c0] sm:$0xff]
        %v709 = vld [vmem:[#allocation4 + $0x1c8] sm:$0xff]
        %v710 = vld [vmem:[#allocation4 + $0x1d0] sm:$0xff]
        %v711 = vld [vmem:[#allocation4 + $0x1d8] sm:$0xff]
        %v712 = vld [vmem:[#allocation4 + $0x1e0] sm:$0xff]
        %v713 = vld [vmem:[#allocation4 + $0x1e8] sm:$0xff]
        %v714 = vld [vmem:[#allocation4 + $0x1f0] sm:$0xff]
        %v715 = vld [vmem:[#allocation4 + $0x1f8] sm:$0xff]
        %s716 = scalar_lea.vmem [#allocation4], 512
        %v717 = vld [vmem:[%s716] sm:$0xff]
        %v718 = vld [vmem:[%s716 + $0x8] sm:$0xff]
        %v719 = vld [vmem:[%s716 + $0x10] sm:$0xff]
        %v720 = vld [vmem:[%s716 + $0x18] sm:$0xff]
        %v721 = vld [vmem:[%s716 + $0x20] sm:$0xff]
        %v722 = vld [vmem:[%s716 + $0x28] sm:$0xff]
        %v723 = vld [vmem:[%s716 + $0x30] sm:$0xff]
        %v724 = vld [vmem:[%s716 + $0x38] sm:$0xff]
        %v725 = vld [vmem:[%s716 + $0x40] sm:$0xff]
        %v726 = vld [vmem:[%s716 + $0x48] sm:$0xff]
        %v727 = vld [vmem:[%s716 + $0x50] sm:$0xff]
        %v728 = vld [vmem:[%s716 + $0x58] sm:$0xff]
        %v729 = vld [vmem:[%s716 + $0x60] sm:$0xff]
        %v730 = vld [vmem:[%s716 + $0x68] sm:$0xff]
        %v731 = vld [vmem:[%s716 + $0x70] sm:$0xff]
        %v732 = vld [vmem:[%s716 + $0x78] sm:$0xff]
        %v733 = vld [vmem:[%s716 + $0x80] sm:$0xff]
        %v734 = vld [vmem:[%s716 + $0x88] sm:$0xff]
        %v735 = vld [vmem:[%s716 + $0x90] sm:$0xff]
        %v736 = vld [vmem:[%s716 + $0x98] sm:$0xff]
        %v737 = vld [vmem:[%s716 + $0xa0] sm:$0xff]
        %v738 = vld [vmem:[%s716 + $0xa8] sm:$0xff]
        %v739 = vld [vmem:[%s716 + $0xb0] sm:$0xff]
        %v740 = vld [vmem:[%s716 + $0xb8] sm:$0xff]
        %v741 = vld [vmem:[%s716 + $0xc0] sm:$0xff]
        %v742 = vld [vmem:[%s716 + $0xc8] sm:$0xff]
        %v743 = vld [vmem:[%s716 + $0xd0] sm:$0xff]
        %v744 = vld [vmem:[%s716 + $0xd8] sm:$0xff]
        %v745 = vld [vmem:[%s716 + $0xe0] sm:$0xff]
        %v746 = vld [vmem:[%s716 + $0xe8] sm:$0xff]
        %v747 = vld [vmem:[%s716 + $0xf0] sm:$0xff]
        %v748 = vld [vmem:[%s716 + $0xf8] sm:$0xff]
        %v749 = vld [vmem:[%s716 + $0x100] sm:$0xff]
        %v750 = vld [vmem:[%s716 + $0x108] sm:$0xff]
        %v751 = vld [vmem:[%s716 + $0x110] sm:$0xff]
        %v752 = vld [vmem:[%s716 + $0x118] sm:$0xff]
        %v753 = vld [vmem:[%s716 + $0x120] sm:$0xff]
        %v754 = vld [vmem:[%s716 + $0x128] sm:$0xff]
        %v755 = vld [vmem:[%s716 + $0x130] sm:$0xff]
        %v756 = vld [vmem:[%s716 + $0x138] sm:$0xff]
        %v757 = vld [vmem:[%s716 + $0x140] sm:$0xff]
        %v758 = vld [vmem:[%s716 + $0x148] sm:$0xff]
        %v759 = vld [vmem:[%s716 + $0x150] sm:$0xff]
        %v760 = vld [vmem:[%s716 + $0x158] sm:$0xff]
        %v761 = vld [vmem:[%s716 + $0x160] sm:$0xff]
        %v762 = vld [vmem:[%s716 + $0x168] sm:$0xff]
        %v763 = vld [vmem:[%s716 + $0x170] sm:$0xff]
        %v764 = vld [vmem:[%s716 + $0x178] sm:$0xff]
        %v765 = vld [vmem:[%s716 + $0x180] sm:$0xff]
        %v766 = vld [vmem:[%s716 + $0x188] sm:$0xff]
        %v767 = vld [vmem:[%s716 + $0x190] sm:$0xff]
        %v768 = vld [vmem:[%s716 + $0x198] sm:$0xff]
        %v769 = vld [vmem:[%s716 + $0x1a0] sm:$0xff]
        %v770 = vld [vmem:[%s716 + $0x1a8] sm:$0xff]
        %v771 = vld [vmem:[%s716 + $0x1b0] sm:$0xff]
        %v772 = vld [vmem:[%s716 + $0x1b8] sm:$0xff]
        %v773 = vld [vmem:[%s716 + $0x1c0] sm:$0xff]
        %v774 = vld [vmem:[%s716 + $0x1c8] sm:$0xff]
        %v775 = vld [vmem:[%s716 + $0x1d0] sm:$0xff]
        %v776 = vld [vmem:[%s716 + $0x1d8] sm:$0xff]
        %v777 = vld [vmem:[%s716 + $0x1e0] sm:$0xff]
        %v778 = vld [vmem:[%s716 + $0x1e8] sm:$0xff]
        %v779 = vld [vmem:[%s716 + $0x1f0] sm:$0xff]
        %v780 = vld [vmem:[%s716 + $0x1f8] sm:$0xff]
        %781 = vmatprep.subr.mxu0 %v718
        %782 = vmatpush1.msra.mxu0 %v717
        %783 = vmatprep.subr.mxu0 %v720
        %784 = vmatpush1.msra.mxu0 %v719
        %785 = vmatprep.subr.mxu0 %v722
        %786 = vmatpush1.msra.mxu0 %v721
        %787 = vmatprep.subr.mxu0 %v724
        %788 = vmatpush1.msra.mxu0 %v723
        %789 = vmatprep.subr.mxu0 %v726
        %790 = vmatpush1.msra.mxu0 %v725
        %791 = vmatprep.subr.mxu0 %v728
        %792 = vmatpush1.msra.mxu0 %v727
        %793 = vmatprep.subr.mxu0 %v730
        %794 = vmatpush1.msra.mxu0 %v729
        %795 = vmatprep.subr.mxu0 %v732
        %796 = vmatpush1.msra.mxu0 %v731
        %797 = vmatprep.subr.mxu0 %v734
        %798 = vmatpush1.msra.mxu0 %v733
        %799 = vmatprep.subr.mxu0 %v736
        %800 = vmatpush1.msra.mxu0 %v735
        %801 = vmatprep.subr.mxu0 %v738
        %802 = vmatpush1.msra.mxu0 %v737
        %803 = vmatprep.subr.mxu0 %v740
        %804 = vmatpush1.msra.mxu0 %v739
        %805 = vmatprep.subr.mxu0 %v742
        %806 = vmatpush1.msra.mxu0 %v741
        %807 = vmatprep.subr.mxu0 %v744
        %808 = vmatpush1.msra.mxu0 %v743
        %809 = vmatprep.subr.mxu0 %v746
        %810 = vmatpush1.msra.mxu0 %v745
        %811 = vmatprep.subr.mxu0 %v748
        %812 = vmatpush1.msra.mxu0 %v747
        %813 = vmatprep.subr.mxu0 %v750
        %814 = vmatpush1.msra.mxu0 %v749
        %815 = vmatprep.subr.mxu0 %v752
        %816 = vmatpush1.msra.mxu0 %v751
        %817 = vmatprep.subr.mxu0 %v754
        %818 = vmatpush1.msra.mxu0 %v753
        %819 = vmatprep.subr.mxu0 %v756
        %820 = vmatpush1.msra.mxu0 %v755
        %821 = vmatprep.subr.mxu0 %v758
        %822 = vmatpush1.msra.mxu0 %v757
        %823 = vmatprep.subr.mxu0 %v760
        %824 = vmatpush1.msra.mxu0 %v759
        %825 = vmatprep.subr.mxu0 %v762
        %826 = vmatpush1.msra.mxu0 %v761
        %827 = vmatprep.subr.mxu0 %v764
        %828 = vmatpush1.msra.mxu0 %v763
        %829 = vmatprep.subr.mxu0 %v766
        %830 = vmatpush1.msra.mxu0 %v765
        %831 = vmatprep.subr.mxu0 %v768
        %832 = vmatpush1.msra.mxu0 %v767
        %833 = vmatprep.subr.mxu0 %v770
        %834 = vmatpush1.msra.mxu0 %v769
        %835 = vmatprep.subr.mxu0 %v772
        %836 = vmatpush1.msra.mxu0 %v771
        %837 = vmatprep.subr.mxu0 %v774
        %838 = vmatpush1.msra.mxu0 %v773
        %839 = vmatprep.subr.mxu0 %v776
        %840 = vmatpush1.msra.mxu0 %v775
        %841 = vmatprep.subr.mxu0 %v778
        %842 = vmatpush1.msra.mxu0 %v777
        %843 = vmatprep.subr.mxu0 %v780
        %844 = vmatpush1.msra.mxu0 %v779
        %845 = vmatprep.mubr.f32.mxu0 %v608
        %846 = vmatmul.mubr.f32.gmra.mrb[0].mxu0 %v606
        %v847 = vpop.f32.mrb[0].mxu0
        %v848 = vadd.f32 0.0, %v847
        %v849 = vpop.f32.mrb[0].mxu0
        %v850 = vadd.f32 0.0, %v849
        %851 = vdwg.mxu0
        %852 = vmatprep.subr.mxu0 %v653
        %853 = vmatpush1.msra.mxu0 %v652
        %854 = vmatprep.subr.mxu0 %v655
        %855 = vmatpush1.msra.mxu0 %v654
        %856 = vmatprep.subr.mxu0 %v657
        %857 = vmatpush1.msra.mxu0 %v656
        %858 = vmatprep.subr.mxu0 %v659
        %859 = vmatpush1.msra.mxu0 %v658
        %860 = vmatprep.subr.mxu0 %v661
        %861 = vmatpush1.msra.mxu0 %v660
        %862 = vmatprep.subr.mxu0 %v663
        %863 = vmatpush1.msra.mxu0 %v662
        %864 = vmatprep.subr.mxu0 %v665
        %865 = vmatpush1.msra.mxu0 %v664
        %866 = vmatprep.subr.mxu0 %v667
        %867 = vmatpush1.msra.mxu0 %v666
        %868 = vmatprep.subr.mxu0 %v669
        %869 = vmatpush1.msra.mxu0 %v668
        %870 = vmatprep.subr.mxu0 %v671
        %871 = vmatpush1.msra.mxu0 %v670
        %872 = vmatprep.subr.mxu0 %v673
        %873 = vmatpush1.msra.mxu0 %v672
        %874 = vmatprep.subr.mxu0 %v675
        %875 = vmatpush1.msra.mxu0 %v674
        %876 = vmatprep.subr.mxu0 %v677
        %877 = vmatpush1.msra.mxu0 %v676
        %878 = vmatprep.subr.mxu0 %v679
        %879 = vmatpush1.msra.mxu0 %v678
        %880 = vmatprep.subr.mxu0 %v681
        %881 = vmatpush1.msra.mxu0 %v680
        %882 = vmatprep.subr.mxu0 %v683
        %883 = vmatpush1.msra.mxu0 %v682
        %884 = vmatprep.subr.mxu0 %v685
        %885 = vmatpush1.msra.mxu0 %v684
        %886 = vmatprep.subr.mxu0 %v687
        %887 = vmatpush1.msra.mxu0 %v686
        %888 = vmatprep.subr.mxu0 %v689
        %889 = vmatpush1.msra.mxu0 %v688
        %890 = vmatprep.subr.mxu0 %v691
        %891 = vmatpush1.msra.mxu0 %v690
        %892 = vmatprep.subr.mxu0 %v693
        %893 = vmatpush1.msra.mxu0 %v692
        %894 = vmatprep.subr.mxu0 %v695
        %895 = vmatpush1.msra.mxu0 %v694
        %896 = vmatprep.subr.mxu0 %v697
        %897 = vmatpush1.msra.mxu0 %v696
        %898 = vmatprep.subr.mxu0 %v699
        %899 = vmatpush1.msra.mxu0 %v698
        %900 = vmatprep.subr.mxu0 %v701
        %901 = vmatpush1.msra.mxu0 %v700
        %902 = vmatprep.subr.mxu0 %v703
        %903 = vmatpush1.msra.mxu0 %v702
        %904 = vmatprep.subr.mxu0 %v705
        %905 = vmatpush1.msra.mxu0 %v704
        %906 = vmatprep.subr.mxu0 %v707
        %907 = vmatpush1.msra.mxu0 %v706
        %908 = vmatprep.subr.mxu0 %v709
        %909 = vmatpush1.msra.mxu0 %v708
        %910 = vmatprep.subr.mxu0 %v711
        %911 = vmatpush1.msra.mxu0 %v710
        %912 = vmatprep.subr.mxu0 %v713
        %913 = vmatpush1.msra.mxu0 %v712
        %914 = vmatprep.subr.mxu0 %v715
        %915 = vmatpush1.msra.mxu0 %v714
        %916 = vmatprep.mubr.f32.mxu0 %v602
        %917 = vmatmul.mubr.f32.gmra.mrb[0].mxu0 %v600
        %v918 = vpop.f32.mrb[0].mxu0
        %v919 = vadd.f32 %v848, %v918
        %v920 = vpop.f32.mrb[0].mxu0
        %v921 = vadd.f32 %v850, %v920
        %922 = vdwg.mxu0
        %s923 = scalar_lea.vmem [#allocation4], 1024
        %v924 = vld [vmem:[%s923] sm:$0xff]
        %v925 = vld [vmem:[%s923 + $0x8] sm:$0xff]
        %v926 = vld [vmem:[%s923 + $0x10] sm:$0xff]
        %v927 = vld [vmem:[%s923 + $0x18] sm:$0xff]
        %v928 = vld [vmem:[%s923 + $0x20] sm:$0xff]
        %v929 = vld [vmem:[%s923 + $0x28] sm:$0xff]
        %v930 = vld [vmem:[%s923 + $0x30] sm:$0xff]
        %v931 = vld [vmem:[%s923 + $0x38] sm:$0xff]
        %v932 = vld [vmem:[%s923 + $0x40] sm:$0xff]
        %v933 = vld [vmem:[%s923 + $0x48] sm:$0xff]
        %v934 = vld [vmem:[%s923 + $0x50] sm:$0xff]
        %v935 = vld [vmem:[%s923 + $0x58] sm:$0xff]
        %v936 = vld [vmem:[%s923 + $0x60] sm:$0xff]
        %v937 = vld [vmem:[%s923 + $0x68] sm:$0xff]
        %v938 = vld [vmem:[%s923 + $0x70] sm:$0xff]
        %v939 = vld [vmem:[%s923 + $0x78] sm:$0xff]
        %v940 = vld [vmem:[%s923 + $0x80] sm:$0xff]
        %v941 = vld [vmem:[%s923 + $0x88] sm:$0xff]
        %v942 = vld [vmem:[%s923 + $0x90] sm:$0xff]
        %v943 = vld [vmem:[%s923 + $0x98] sm:$0xff]
        %v944 = vld [vmem:[%s923 + $0xa0] sm:$0xff]
        %v945 = vld [vmem:[%s923 + $0xa8] sm:$0xff]
        %v946 = vld [vmem:[%s923 + $0xb0] sm:$0xff]
        %v947 = vld [vmem:[%s923 + $0xb8] sm:$0xff]
        %v948 = vld [vmem:[%s923 + $0xc0] sm:$0xff]
        %v949 = vld [vmem:[%s923 + $0xc8] sm:$0xff]
        %v950 = vld [vmem:[%s923 + $0xd0] sm:$0xff]
        %v951 = vld [vmem:[%s923 + $0xd8] sm:$0xff]
        %v952 = vld [vmem:[%s923 + $0xe0] sm:$0xff]
        %v953 = vld [vmem:[%s923 + $0xe8] sm:$0xff]
        %v954 = vld [vmem:[%s923 + $0xf0] sm:$0xff]
        %v955 = vld [vmem:[%s923 + $0xf8] sm:$0xff]
        %v956 = vld [vmem:[%s923 + $0x100] sm:$0xff]
        %v957 = vld [vmem:[%s923 + $0x108] sm:$0xff]
        %v958 = vld [vmem:[%s923 + $0x110] sm:$0xff]
        %v959 = vld [vmem:[%s923 + $0x118] sm:$0xff]
        %v960 = vld [vmem:[%s923 + $0x120] sm:$0xff]
        %v961 = vld [vmem:[%s923 + $0x128] sm:$0xff]
        %v962 = vld [vmem:[%s923 + $0x130] sm:$0xff]
        %v963 = vld [vmem:[%s923 + $0x138] sm:$0xff]
        %v964 = vld [vmem:[%s923 + $0x140] sm:$0xff]
        %v965 = vld [vmem:[%s923 + $0x148] sm:$0xff]
        %v966 = vld [vmem:[%s923 + $0x150] sm:$0xff]
        %v967 = vld [vmem:[%s923 + $0x158] sm:$0xff]
        %v968 = vld [vmem:[%s923 + $0x160] sm:$0xff]
        %v969 = vld [vmem:[%s923 + $0x168] sm:$0xff]
        %v970 = vld [vmem:[%s923 + $0x170] sm:$0xff]
        %v971 = vld [vmem:[%s923 + $0x178] sm:$0xff]
        %v972 = vld [vmem:[%s923 + $0x180] sm:$0xff]
        %v973 = vld [vmem:[%s923 + $0x188] sm:$0xff]
        %v974 = vld [vmem:[%s923 + $0x190] sm:$0xff]
        %v975 = vld [vmem:[%s923 + $0x198] sm:$0xff]
        %v976 = vld [vmem:[%s923 + $0x1a0] sm:$0xff]
        %v977 = vld [vmem:[%s923 + $0x1a8] sm:$0xff]
        %v978 = vld [vmem:[%s923 + $0x1b0] sm:$0xff]
        %v979 = vld [vmem:[%s923 + $0x1b8] sm:$0xff]
        %v980 = vld [vmem:[%s923 + $0x1c0] sm:$0xff]
        %v981 = vld [vmem:[%s923 + $0x1c8] sm:$0xff]
        %v982 = vld [vmem:[%s923 + $0x1d0] sm:$0xff]
        %v983 = vld [vmem:[%s923 + $0x1d8] sm:$0xff]
        %v984 = vld [vmem:[%s923 + $0x1e0] sm:$0xff]
        %v985 = vld [vmem:[%s923 + $0x1e8] sm:$0xff]
        %v986 = vld [vmem:[%s923 + $0x1f0] sm:$0xff]
        %v987 = vld [vmem:[%s923 + $0x1f8] sm:$0xff]
        %988 = vmatprep.subr.mxu0 %v925
        %989 = vmatpush1.msra.mxu0 %v924
        %990 = vmatprep.subr.mxu0 %v927
        %991 = vmatpush1.msra.mxu0 %v926
        %992 = vmatprep.subr.mxu0 %v929
        %993 = vmatpush1.msra.mxu0 %v928
        %994 = vmatprep.subr.mxu0 %v931
        %995 = vmatpush1.msra.mxu0 %v930
        %996 = vmatprep.subr.mxu0 %v933
        %997 = vmatpush1.msra.mxu0 %v932
        %998 = vmatprep.subr.mxu0 %v935
        %999 = vmatpush1.msra.mxu0 %v934
        %1000 = vmatprep.subr.mxu0 %v937
        %1001 = vmatpush1.msra.mxu0 %v936
        %1002 = vmatprep.subr.mxu0 %v939
        %1003 = vmatpush1.msra.mxu0 %v938
        %1004 = vmatprep.subr.mxu0 %v941
        %1005 = vmatpush1.msra.mxu0 %v940
        %1006 = vmatprep.subr.mxu0 %v943
        %1007 = vmatpush1.msra.mxu0 %v942
        %1008 = vmatprep.subr.mxu0 %v945
        %1009 = vmatpush1.msra.mxu0 %v944
        %1010 = vmatprep.subr.mxu0 %v947
        %1011 = vmatpush1.msra.mxu0 %v946
        %1012 = vmatprep.subr.mxu0 %v949
        %1013 = vmatpush1.msra.mxu0 %v948
        %1014 = vmatprep.subr.mxu0 %v951
        %1015 = vmatpush1.msra.mxu0 %v950
        %1016 = vmatprep.subr.mxu0 %v953
        %1017 = vmatpush1.msra.mxu0 %v952
        %1018 = vmatprep.subr.mxu0 %v955
        %1019 = vmatpush1.msra.mxu0 %v954
        %1020 = vmatprep.subr.mxu0 %v957
        %1021 = vmatpush1.msra.mxu0 %v956
        %1022 = vmatprep.subr.mxu0 %v959
        %1023 = vmatpush1.msra.mxu0 %v958
        %1024 = vmatprep.subr.mxu0 %v961
        %1025 = vmatpush1.msra.mxu0 %v960
        %1026 = vmatprep.subr.mxu0 %v963
        %1027 = vmatpush1.msra.mxu0 %v962
        %1028 = vmatprep.subr.mxu0 %v965
        %1029 = vmatpush1.msra.mxu0 %v964
        %1030 = vmatprep.subr.mxu0 %v967
        %1031 = vmatpush1.msra.mxu0 %v966
        %1032 = vmatprep.subr.mxu0 %v969
        %1033 = vmatpush1.msra.mxu0 %v968
        %1034 = vmatprep.subr.mxu0 %v971
        %1035 = vmatpush1.msra.mxu0 %v970
        %1036 = vmatprep.subr.mxu0 %v973
        %1037 = vmatpush1.msra.mxu0 %v972
        %1038 = vmatprep.subr.mxu0 %v975
        %1039 = vmatpush1.msra.mxu0 %v974
        %1040 = vmatprep.subr.mxu0 %v977
        %1041 = vmatpush1.msra.mxu0 %v976
        %1042 = vmatprep.subr.mxu0 %v979
        %1043 = vmatpush1.msra.mxu0 %v978
        %1044 = vmatprep.subr.mxu0 %v981
        %1045 = vmatpush1.msra.mxu0 %v980
        %1046 = vmatprep.subr.mxu0 %v983
        %1047 = vmatpush1.msra.mxu0 %v982
        %1048 = vmatprep.subr.mxu0 %v985
        %1049 = vmatpush1.msra.mxu0 %v984
        %1050 = vmatprep.subr.mxu0 %v987
        %1051 = vmatpush1.msra.mxu0 %v986
        %1052 = vmatprep.mubr.f32.mxu0 %v614
        %1053 = vmatmul.mubr.f32.gmra.mrb[0].mxu0 %v612
        %v1054 = vpop.f32.mrb[0].mxu0
        %v1055 = vadd.f32 0.0, %v1054
        %v1056 = vpop.f32.mrb[0].mxu0
        %v1057 = vadd.f32 0.0, %v1056
        %1058 = vdwg.mxu0
        %v1059 = vadd.f32 %v919, %v1055
        %v1060 = vadd.f32 %v921, %v1057
        %s1061 = scalar_lea.vmem [#allocation4], 1536
        %v1062 = vld [vmem:[%s1061] sm:$0xff]
        %v1063 = vld [vmem:[%s1061 + $0x8] sm:$0xff]
        %v1064 = vld [vmem:[%s1061 + $0x10] sm:$0xff]
        %v1065 = vld [vmem:[%s1061 + $0x18] sm:$0xff]
        %v1066 = vld [vmem:[%s1061 + $0x20] sm:$0xff]
        %v1067 = vld [vmem:[%s1061 + $0x28] sm:$0xff]
        %v1068 = vld [vmem:[%s1061 + $0x30] sm:$0xff]
        %v1069 = vld [vmem:[%s1061 + $0x38] sm:$0xff]
        %v1070 = vld [vmem:[%s1061 + $0x40] sm:$0xff]
        %v1071 = vld [vmem:[%s1061 + $0x48] sm:$0xff]
        %v1072 = vld [vmem:[%s1061 + $0x50] sm:$0xff]
        %v1073 = vld [vmem:[%s1061 + $0x58] sm:$0xff]
        %v1074 = vld [vmem:[%s1061 + $0x60] sm:$0xff]
        %v1075 = vld [vmem:[%s1061 + $0x68] sm:$0xff]
        %v1076 = vld [vmem:[%s1061 + $0x70] sm:$0xff]
        %v1077 = vld [vmem:[%s1061 + $0x78] sm:$0xff]
        %v1078 = vld [vmem:[%s1061 + $0x80] sm:$0xff]
        %v1079 = vld [vmem:[%s1061 + $0x88] sm:$0xff]
        %v1080 = vld [vmem:[%s1061 + $0x90] sm:$0xff]
        %v1081 = vld [vmem:[%s1061 + $0x98] sm:$0xff]
        %v1082 = vld [vmem:[%s1061 + $0xa0] sm:$0xff]
        %v1083 = vld [vmem:[%s1061 + $0xa8] sm:$0xff]
        %v1084 = vld [vmem:[%s1061 + $0xb0] sm:$0xff]
        %v1085 = vld [vmem:[%s1061 + $0xb8] sm:$0xff]
        %v1086 = vld [vmem:[%s1061 + $0xc0] sm:$0xff]
        %v1087 = vld [vmem:[%s1061 + $0xc8] sm:$0xff]
        %v1088 = vld [vmem:[%s1061 + $0xd0] sm:$0xff]
        %v1089 = vld [vmem:[%s1061 + $0xd8] sm:$0xff]
        %v1090 = vld [vmem:[%s1061 + $0xe0] sm:$0xff]
        %v1091 = vld [vmem:[%s1061 + $0xe8] sm:$0xff]
        %v1092 = vld [vmem:[%s1061 + $0xf0] sm:$0xff]
        %v1093 = vld [vmem:[%s1061 + $0xf8] sm:$0xff]
        %v1094 = vld [vmem:[%s1061 + $0x100] sm:$0xff]
        %v1095 = vld [vmem:[%s1061 + $0x108] sm:$0xff]
        %v1096 = vld [vmem:[%s1061 + $0x110] sm:$0xff]
        %v1097 = vld [vmem:[%s1061 + $0x118] sm:$0xff]
        %v1098 = vld [vmem:[%s1061 + $0x120] sm:$0xff]
        %v1099 = vld [vmem:[%s1061 + $0x128] sm:$0xff]
        %v1100 = vld [vmem:[%s1061 + $0x130] sm:$0xff]
        %v1101 = vld [vmem:[%s1061 + $0x138] sm:$0xff]
        %v1102 = vld [vmem:[%s1061 + $0x140] sm:$0xff]
        %v1103 = vld [vmem:[%s1061 + $0x148] sm:$0xff]
        %v1104 = vld [vmem:[%s1061 + $0x150] sm:$0xff]
        %v1105 = vld [vmem:[%s1061 + $0x158] sm:$0xff]
        %v1106 = vld [vmem:[%s1061 + $0x160] sm:$0xff]
        %v1107 = vld [vmem:[%s1061 + $0x168] sm:$0xff]
        %v1108 = vld [vmem:[%s1061 + $0x170] sm:$0xff]
        %v1109 = vld [vmem:[%s1061 + $0x178] sm:$0xff]
        %v1110 = vld [vmem:[%s1061 + $0x180] sm:$0xff]
        %v1111 = vld [vmem:[%s1061 + $0x188] sm:$0xff]
        %v1112 = vld [vmem:[%s1061 + $0x190] sm:$0xff]
        %v1113 = vld [vmem:[%s1061 + $0x198] sm:$0xff]
        %v1114 = vld [vmem:[%s1061 + $0x1a0] sm:$0xff]
        %v1115 = vld [vmem:[%s1061 + $0x1a8] sm:$0xff]
        %v1116 = vld [vmem:[%s1061 + $0x1b0] sm:$0xff]
        %v1117 = vld [vmem:[%s1061 + $0x1b8] sm:$0xff]
        %v1118 = vld [vmem:[%s1061 + $0x1c0] sm:$0xff]
        %v1119 = vld [vmem:[%s1061 + $0x1c8] sm:$0xff]
        %v1120 = vld [vmem:[%s1061 + $0x1d0] sm:$0xff]
        %v1121 = vld [vmem:[%s1061 + $0x1d8] sm:$0xff]
        %v1122 = vld [vmem:[%s1061 + $0x1e0] sm:$0xff]
        %v1123 = vld [vmem:[%s1061 + $0x1e8] sm:$0xff]
        %v1124 = vld [vmem:[%s1061 + $0x1f0] sm:$0xff]
        %v1125 = vld [vmem:[%s1061 + $0x1f8] sm:$0xff]
        %1126 = vmatprep.subr.mxu0 %v1063
        %1127 = vmatpush1.msra.mxu0 %v1062
        %1128 = vmatprep.subr.mxu0 %v1065
        %1129 = vmatpush1.msra.mxu0 %v1064
        %1130 = vmatprep.subr.mxu0 %v1067
        %1131 = vmatpush1.msra.mxu0 %v1066
        %1132 = vmatprep.subr.mxu0 %v1069
        %1133 = vmatpush1.msra.mxu0 %v1068
        %1134 = vmatprep.subr.mxu0 %v1071
        %1135 = vmatpush1.msra.mxu0 %v1070
        %1136 = vmatprep.subr.mxu0 %v1073
        %1137 = vmatpush1.msra.mxu0 %v1072
        %1138 = vmatprep.subr.mxu0 %v1075
        %1139 = vmatpush1.msra.mxu0 %v1074
        %1140 = vmatprep.subr.mxu0 %v1077
        %1141 = vmatpush1.msra.mxu0 %v1076
        %1142 = vmatprep.subr.mxu0 %v1079
        %1143 = vmatpush1.msra.mxu0 %v1078
        %1144 = vmatprep.subr.mxu0 %v1081
        %1145 = vmatpush1.msra.mxu0 %v1080
        %1146 = vmatprep.subr.mxu0 %v1083
        %1147 = vmatpush1.msra.mxu0 %v1082
        %1148 = vmatprep.subr.mxu0 %v1085
        %1149 = vmatpush1.msra.mxu0 %v1084
        %1150 = vmatprep.subr.mxu0 %v1087
        %1151 = vmatpush1.msra.mxu0 %v1086
        %1152 = vmatprep.subr.mxu0 %v1089
        %1153 = vmatpush1.msra.mxu0 %v1088
        %1154 = vmatprep.subr.mxu0 %v1091
        %1155 = vmatpush1.msra.mxu0 %v1090
        %1156 = vmatprep.subr.mxu0 %v1093
        %1157 = vmatpush1.msra.mxu0 %v1092
        %1158 = vmatprep.subr.mxu0 %v1095
        %1159 = vmatpush1.msra.mxu0 %v1094
        %1160 = vmatprep.subr.mxu0 %v1097
        %1161 = vmatpush1.msra.mxu0 %v1096
        %1162 = vmatprep.subr.mxu0 %v1099
        %1163 = vmatpush1.msra.mxu0 %v1098
        %1164 = vmatprep.subr.mxu0 %v1101
        %1165 = vmatpush1.msra.mxu0 %v1100
        %1166 = vmatprep.subr.mxu0 %v1103
        %1167 = vmatpush1.msra.mxu0 %v1102
        %1168 = vmatprep.subr.mxu0 %v1105
        %1169 = vmatpush1.msra.mxu0 %v1104
        %1170 = vmatprep.subr.mxu0 %v1107
        %1171 = vmatpush1.msra.mxu0 %v1106
        %1172 = vmatprep.subr.mxu0 %v1109
        %1173 = vmatpush1.msra.mxu0 %v1108
        %1174 = vmatprep.subr.mxu0 %v1111
        %1175 = vmatpush1.msra.mxu0 %v1110
        %1176 = vmatprep.subr.mxu0 %v1113
        %1177 = vmatpush1.msra.mxu0 %v1112
        %1178 = vmatprep.subr.mxu0 %v1115
        %1179 = vmatpush1.msra.mxu0 %v1114
        %1180 = vmatprep.subr.mxu0 %v1117
        %1181 = vmatpush1.msra.mxu0 %v1116
        %1182 = vmatprep.subr.mxu0 %v1119
        %1183 = vmatpush1.msra.mxu0 %v1118
        %1184 = vmatprep.subr.mxu0 %v1121
        %1185 = vmatpush1.msra.mxu0 %v1120
        %1186 = vmatprep.subr.mxu0 %v1123
        %1187 = vmatpush1.msra.mxu0 %v1122
        %1188 = vmatprep.subr.mxu0 %v1125
        %1189 = vmatpush1.msra.mxu0 %v1124
        %1190 = vmatprep.mubr.f32.mxu0 %v620
        %1191 = vmatmul.mubr.f32.gmra.mrb[0].mxu0 %v618
        %v1192 = vpop.f32.mrb[0].mxu0
        %v1193 = vadd.f32 0.0, %v1192
        %v1194 = vpop.f32.mrb[0].mxu0
        %v1195 = vadd.f32 0.0, %v1194
        %1196 = vdwg.mxu0
        %v1197 = vadd.f32 %v1059, %v1193
        %v1198 = vadd.f32 %v1060, %v1195
        %s1199 = scalar_lea.vmem [#allocation4], 2048
        %v1200 = vld [vmem:[%s1199] sm:$0xff]
        %v1201 = vld [vmem:[%s1199 + $0x8] sm:$0xff]
        %v1202 = vld [vmem:[%s1199 + $0x10] sm:$0xff]
        %v1203 = vld [vmem:[%s1199 + $0x18] sm:$0xff]
        %v1204 = vld [vmem:[%s1199 + $0x20] sm:$0xff]
        %v1205 = vld [vmem:[%s1199 + $0x28] sm:$0xff]
        %v1206 = vld [vmem:[%s1199 + $0x30] sm:$0xff]
        %v1207 = vld [vmem:[%s1199 + $0x38] sm:$0xff]
        %v1208 = vld [vmem:[%s1199 + $0x40] sm:$0xff]
        %v1209 = vld [vmem:[%s1199 + $0x48] sm:$0xff]
        %v1210 = vld [vmem:[%s1199 + $0x50] sm:$0xff]
        %v1211 = vld [vmem:[%s1199 + $0x58] sm:$0xff]
        %v1212 = vld [vmem:[%s1199 + $0x60] sm:$0xff]
        %v1213 = vld [vmem:[%s1199 + $0x68] sm:$0xff]
        %v1214 = vld [vmem:[%s1199 + $0x70] sm:$0xff]
        %v1215 = vld [vmem:[%s1199 + $0x78] sm:$0xff]
        %v1216 = vld [vmem:[%s1199 + $0x80] sm:$0xff]
        %v1217 = vld [vmem:[%s1199 + $0x88] sm:$0xff]
        %v1218 = vld [vmem:[%s1199 + $0x90] sm:$0xff]
        %v1219 = vld [vmem:[%s1199 + $0x98] sm:$0xff]
        %v1220 = vld [vmem:[%s1199 + $0xa0] sm:$0xff]
        %v1221 = vld [vmem:[%s1199 + $0xa8] sm:$0xff]
        %v1222 = vld [vmem:[%s1199 + $0xb0] sm:$0xff]
        %v1223 = vld [vmem:[%s1199 + $0xb8] sm:$0xff]
        %v1224 = vld [vmem:[%s1199 + $0xc0] sm:$0xff]
        %v1225 = vld [vmem:[%s1199 + $0xc8] sm:$0xff]
        %v1226 = vld [vmem:[%s1199 + $0xd0] sm:$0xff]
        %v1227 = vld [vmem:[%s1199 + $0xd8] sm:$0xff]
        %v1228 = vld [vmem:[%s1199 + $0xe0] sm:$0xff]
        %v1229 = vld [vmem:[%s1199 + $0xe8] sm:$0xff]
        %v1230 = vld [vmem:[%s1199 + $0xf0] sm:$0xff]
        %v1231 = vld [vmem:[%s1199 + $0xf8] sm:$0xff]
        %v1232 = vld [vmem:[%s1199 + $0x100] sm:$0xff]
        %v1233 = vld [vmem:[%s1199 + $0x108] sm:$0xff]
        %v1234 = vld [vmem:[%s1199 + $0x110] sm:$0xff]
        %v1235 = vld [vmem:[%s1199 + $0x118] sm:$0xff]
        %v1236 = vld [vmem:[%s1199 + $0x120] sm:$0xff]
        %v1237 = vld [vmem:[%s1199 + $0x128] sm:$0xff]
        %v1238 = vld [vmem:[%s1199 + $0x130] sm:$0xff]
        %v1239 = vld [vmem:[%s1199 + $0x138] sm:$0xff]
        %v1240 = vld [vmem:[%s1199 + $0x140] sm:$0xff]
        %v1241 = vld [vmem:[%s1199 + $0x148] sm:$0xff]
        %v1242 = vld [vmem:[%s1199 + $0x150] sm:$0xff]
        %v1243 = vld [vmem:[%s1199 + $0x158] sm:$0xff]
        %v1244 = vld [vmem:[%s1199 + $0x160] sm:$0xff]
        %v1245 = vld [vmem:[%s1199 + $0x168] sm:$0xff]
        %v1246 = vld [vmem:[%s1199 + $0x170] sm:$0xff]
        %v1247 = vld [vmem:[%s1199 + $0x178] sm:$0xff]
        %v1248 = vld [vmem:[%s1199 + $0x180] sm:$0xff]
        %v1249 = vld [vmem:[%s1199 + $0x188] sm:$0xff]
        %v1250 = vld [vmem:[%s1199 + $0x190] sm:$0xff]
        %v1251 = vld [vmem:[%s1199 + $0x198] sm:$0xff]
        %v1252 = vld [vmem:[%s1199 + $0x1a0] sm:$0xff]
        %v1253 = vld [vmem:[%s1199 + $0x1a8] sm:$0xff]
        %v1254 = vld [vmem:[%s1199 + $0x1b0] sm:$0xff]
        %v1255 = vld [vmem:[%s1199 + $0x1b8] sm:$0xff]
        %v1256 = vld [vmem:[%s1199 + $0x1c0] sm:$0xff]
        %v1257 = vld [vmem:[%s1199 + $0x1c8] sm:$0xff]
        %v1258 = vld [vmem:[%s1199 + $0x1d0] sm:$0xff]
        %v1259 = vld [vmem:[%s1199 + $0x1d8] sm:$0xff]
        %v1260 = vld [vmem:[%s1199 + $0x1e0] sm:$0xff]
        %v1261 = vld [vmem:[%s1199 + $0x1e8] sm:$0xff]
        %v1262 = vld [vmem:[%s1199 + $0x1f0] sm:$0xff]
        %v1263 = vld [vmem:[%s1199 + $0x1f8] sm:$0xff]
        %1264 = vmatprep.subr.mxu0 %v1201
        %1265 = vmatpush1.msra.mxu0 %v1200
        %1266 = vmatprep.subr.mxu0 %v1203
        %1267 = vmatpush1.msra.mxu0 %v1202
        %1268 = vmatprep.subr.mxu0 %v1205
        %1269 = vmatpush1.msra.mxu0 %v1204
        %1270 = vmatprep.subr.mxu0 %v1207
        %1271 = vmatpush1.msra.mxu0 %v1206
        %1272 = vmatprep.subr.mxu0 %v1209
        %1273 = vmatpush1.msra.mxu0 %v1208
        %1274 = vmatprep.subr.mxu0 %v1211
        %1275 = vmatpush1.msra.mxu0 %v1210
        %1276 = vmatprep.subr.mxu0 %v1213
        %1277 = vmatpush1.msra.mxu0 %v1212
        %1278 = vmatprep.subr.mxu0 %v1215
        %1279 = vmatpush1.msra.mxu0 %v1214
        %1280 = vmatprep.subr.mxu0 %v1217
        %1281 = vmatpush1.msra.mxu0 %v1216
        %1282 = vmatprep.subr.mxu0 %v1219
        %1283 = vmatpush1.msra.mxu0 %v1218
        %1284 = vmatprep.subr.mxu0 %v1221
        %1285 = vmatpush1.msra.mxu0 %v1220
        %1286 = vmatprep.subr.mxu0 %v1223
        %1287 = vmatpush1.msra.mxu0 %v1222
        %1288 = vmatprep.subr.mxu0 %v1225
        %1289 = vmatpush1.msra.mxu0 %v1224
        %1290 = vmatprep.subr.mxu0 %v1227
        %1291 = vmatpush1.msra.mxu0 %v1226
        %1292 = vmatprep.subr.mxu0 %v1229
        %1293 = vmatpush1.msra.mxu0 %v1228
        %1294 = vmatprep.subr.mxu0 %v1231
        %1295 = vmatpush1.msra.mxu0 %v1230
        %1296 = vmatprep.subr.mxu0 %v1233
        %1297 = vmatpush1.msra.mxu0 %v1232
        %1298 = vmatprep.subr.mxu0 %v1235
        %1299 = vmatpush1.msra.mxu0 %v1234
        %1300 = vmatprep.subr.mxu0 %v1237
        %1301 = vmatpush1.msra.mxu0 %v1236
        %1302 = vmatprep.subr.mxu0 %v1239
        %1303 = vmatpush1.msra.mxu0 %v1238
        %1304 = vmatprep.subr.mxu0 %v1241
        %1305 = vmatpush1.msra.mxu0 %v1240
        %1306 = vmatprep.subr.mxu0 %v1243
        %1307 = vmatpush1.msra.mxu0 %v1242
        %1308 = vmatprep.subr.mxu0 %v1245
        %1309 = vmatpush1.msra.mxu0 %v1244
        %1310 = vmatprep.subr.mxu0 %v1247
        %1311 = vmatpush1.msra.mxu0 %v1246
        %1312 = vmatprep.subr.mxu0 %v1249
        %1313 = vmatpush1.msra.mxu0 %v1248
        %1314 = vmatprep.subr.mxu0 %v1251
        %1315 = vmatpush1.msra.mxu0 %v1250
        %1316 = vmatprep.subr.mxu0 %v1253
        %1317 = vmatpush1.msra.mxu0 %v1252
        %1318 = vmatprep.subr.mxu0 %v1255
        %1319 = vmatpush1.msra.mxu0 %v1254
        %1320 = vmatprep.subr.mxu0 %v1257
        %1321 = vmatpush1.msra.mxu0 %v1256
        %1322 = vmatprep.subr.mxu0 %v1259
        %1323 = vmatpush1.msra.mxu0 %v1258
        %1324 = vmatprep.subr.mxu0 %v1261
        %1325 = vmatpush1.msra.mxu0 %v1260
        %1326 = vmatprep.subr.mxu0 %v1263
        %1327 = vmatpush1.msra.mxu0 %v1262
        %1328 = vmatprep.mubr.f32.mxu0 %v626
        %1329 = vmatmul.mubr.f32.gmra.mrb[0].mxu0 %v624
        %v1330 = vpop.f32.mrb[0].mxu0
        %v1331 = vadd.f32 0.0, %v1330
        %v1332 = vpop.f32.mrb[0].mxu0
        %v1333 = vadd.f32 0.0, %v1332
        %1334 = vdwg.mxu0
        %v1335 = vadd.f32 %v1197, %v1331
        %v1336 = vadd.f32 %v1198, %v1333
        %s1337 = scalar_lea.vmem [#allocation4], 2560
        %v1338 = vld [vmem:[%s1337] sm:$0xff]
        %v1339 = vld [vmem:[%s1337 + $0x8] sm:$0xff]
        %v1340 = vld [vmem:[%s1337 + $0x10] sm:$0xff]
        %v1341 = vld [vmem:[%s1337 + $0x18] sm:$0xff]
        %v1342 = vld [vmem:[%s1337 + $0x20] sm:$0xff]
        %v1343 = vld [vmem:[%s1337 + $0x28] sm:$0xff]
        %v1344 = vld [vmem:[%s1337 + $0x30] sm:$0xff]
        %v1345 = vld [vmem:[%s1337 + $0x38] sm:$0xff]
        %v1346 = vld [vmem:[%s1337 + $0x40] sm:$0xff]
        %v1347 = vld [vmem:[%s1337 + $0x48] sm:$0xff]
        %v1348 = vld [vmem:[%s1337 + $0x50] sm:$0xff]
        %v1349 = vld [vmem:[%s1337 + $0x58] sm:$0xff]
        %v1350 = vld [vmem:[%s1337 + $0x60] sm:$0xff]
        %v1351 = vld [vmem:[%s1337 + $0x68] sm:$0xff]
        %v1352 = vld [vmem:[%s1337 + $0x70] sm:$0xff]
        %v1353 = vld [vmem:[%s1337 + $0x78] sm:$0xff]
        %v1354 = vld [vmem:[%s1337 + $0x80] sm:$0xff]
        %v1355 = vld [vmem:[%s1337 + $0x88] sm:$0xff]
        %v1356 = vld [vmem:[%s1337 + $0x90] sm:$0xff]
        %v1357 = vld [vmem:[%s1337 + $0x98] sm:$0xff]
        %v1358 = vld [vmem:[%s1337 + $0xa0] sm:$0xff]
        %v1359 = vld [vmem:[%s1337 + $0xa8] sm:$0xff]
        %v1360 = vld [vmem:[%s1337 + $0xb0] sm:$0xff]
        %v1361 = vld [vmem:[%s1337 + $0xb8] sm:$0xff]
        %v1362 = vld [vmem:[%s1337 + $0xc0] sm:$0xff]
        %v1363 = vld [vmem:[%s1337 + $0xc8] sm:$0xff]
        %v1364 = vld [vmem:[%s1337 + $0xd0] sm:$0xff]
        %v1365 = vld [vmem:[%s1337 + $0xd8] sm:$0xff]
        %v1366 = vld [vmem:[%s1337 + $0xe0] sm:$0xff]
        %v1367 = vld [vmem:[%s1337 + $0xe8] sm:$0xff]
        %v1368 = vld [vmem:[%s1337 + $0xf0] sm:$0xff]
        %v1369 = vld [vmem:[%s1337 + $0xf8] sm:$0xff]
        %v1370 = vld [vmem:[%s1337 + $0x100] sm:$0xff]
        %v1371 = vld [vmem:[%s1337 + $0x108] sm:$0xff]
        %v1372 = vld [vmem:[%s1337 + $0x110] sm:$0xff]
        %v1373 = vld [vmem:[%s1337 + $0x118] sm:$0xff]
        %v1374 = vld [vmem:[%s1337 + $0x120] sm:$0xff]
        %v1375 = vld [vmem:[%s1337 + $0x128] sm:$0xff]
        %v1376 = vld [vmem:[%s1337 + $0x130] sm:$0xff]
        %v1377 = vld [vmem:[%s1337 + $0x138] sm:$0xff]
        %v1378 = vld [vmem:[%s1337 + $0x140] sm:$0xff]
        %v1379 = vld [vmem:[%s1337 + $0x148] sm:$0xff]
        %v1380 = vld [vmem:[%s1337 + $0x150] sm:$0xff]
        %v1381 = vld [vmem:[%s1337 + $0x158] sm:$0xff]
        %v1382 = vld [vmem:[%s1337 + $0x160] sm:$0xff]
        %v1383 = vld [vmem:[%s1337 + $0x168] sm:$0xff]
        %v1384 = vld [vmem:[%s1337 + $0x170] sm:$0xff]
        %v1385 = vld [vmem:[%s1337 + $0x178] sm:$0xff]
        %v1386 = vld [vmem:[%s1337 + $0x180] sm:$0xff]
        %v1387 = vld [vmem:[%s1337 + $0x188] sm:$0xff]
        %v1388 = vld [vmem:[%s1337 + $0x190] sm:$0xff]
        %v1389 = vld [vmem:[%s1337 + $0x198] sm:$0xff]
        %v1390 = vld [vmem:[%s1337 + $0x1a0] sm:$0xff]
        %v1391 = vld [vmem:[%s1337 + $0x1a8] sm:$0xff]
        %v1392 = vld [vmem:[%s1337 + $0x1b0] sm:$0xff]
        %v1393 = vld [vmem:[%s1337 + $0x1b8] sm:$0xff]
        %v1394 = vld [vmem:[%s1337 + $0x1c0] sm:$0xff]
        %v1395 = vld [vmem:[%s1337 + $0x1c8] sm:$0xff]
        %v1396 = vld [vmem:[%s1337 + $0x1d0] sm:$0xff]
        %v1397 = vld [vmem:[%s1337 + $0x1d8] sm:$0xff]
        %v1398 = vld [vmem:[%s1337 + $0x1e0] sm:$0xff]
        %v1399 = vld [vmem:[%s1337 + $0x1e8] sm:$0xff]
        %v1400 = vld [vmem:[%s1337 + $0x1f0] sm:$0xff]
        %v1401 = vld [vmem:[%s1337 + $0x1f8] sm:$0xff]
        %1402 = vmatprep.subr.mxu0 %v1339
        %1403 = vmatpush1.msra.mxu0 %v1338
        %1404 = vmatprep.subr.mxu0 %v1341
        %1405 = vmatpush1.msra.mxu0 %v1340
        %1406 = vmatprep.subr.mxu0 %v1343
        %1407 = vmatpush1.msra.mxu0 %v1342
        %1408 = vmatprep.subr.mxu0 %v1345
        %1409 = vmatpush1.msra.mxu0 %v1344
        %1410 = vmatprep.subr.mxu0 %v1347
        %1411 = vmatpush1.msra.mxu0 %v1346
        %1412 = vmatprep.subr.mxu0 %v1349
        %1413 = vmatpush1.msra.mxu0 %v1348
        %1414 = vmatprep.subr.mxu0 %v1351
        %1415 = vmatpush1.msra.mxu0 %v1350
        %1416 = vmatprep.subr.mxu0 %v1353
        %1417 = vmatpush1.msra.mxu0 %v1352
        %1418 = vmatprep.subr.mxu0 %v1355
        %1419 = vmatpush1.msra.mxu0 %v1354
        %1420 = vmatprep.subr.mxu0 %v1357
        %1421 = vmatpush1.msra.mxu0 %v1356
        %1422 = vmatprep.subr.mxu0 %v1359
        %1423 = vmatpush1.msra.mxu0 %v1358
        %1424 = vmatprep.subr.mxu0 %v1361
        %1425 = vmatpush1.msra.mxu0 %v1360
        %1426 = vmatprep.subr.mxu0 %v1363
        %1427 = vmatpush1.msra.mxu0 %v1362
        %1428 = vmatprep.subr.mxu0 %v1365
        %1429 = vmatpush1.msra.mxu0 %v1364
        %1430 = vmatprep.subr.mxu0 %v1367
        %1431 = vmatpush1.msra.mxu0 %v1366
        %1432 = vmatprep.subr.mxu0 %v1369
        %1433 = vmatpush1.msra.mxu0 %v1368
        %1434 = vmatprep.subr.mxu0 %v1371
        %1435 = vmatpush1.msra.mxu0 %v1370
        %1436 = vmatprep.subr.mxu0 %v1373
        %1437 = vmatpush1.msra.mxu0 %v1372
        %1438 = vmatprep.subr.mxu0 %v1375
        %1439 = vmatpush1.msra.mxu0 %v1374
        %1440 = vmatprep.subr.mxu0 %v1377
        %1441 = vmatpush1.msra.mxu0 %v1376
        %1442 = vmatprep.subr.mxu0 %v1379
        %1443 = vmatpush1.msra.mxu0 %v1378
        %1444 = vmatprep.subr.mxu0 %v1381
        %1445 = vmatpush1.msra.mxu0 %v1380
        %1446 = vmatprep.subr.mxu0 %v1383
        %1447 = vmatpush1.msra.mxu0 %v1382
        %1448 = vmatprep.subr.mxu0 %v1385
        %1449 = vmatpush1.msra.mxu0 %v1384
        %1450 = vmatprep.subr.mxu0 %v1387
        %1451 = vmatpush1.msra.mxu0 %v1386
        %1452 = vmatprep.subr.mxu0 %v1389
        %1453 = vmatpush1.msra.mxu0 %v1388
        %1454 = vmatprep.subr.mxu0 %v1391
        %1455 = vmatpush1.msra.mxu0 %v1390
        %1456 = vmatprep.subr.mxu0 %v1393
        %1457 = vmatpush1.msra.mxu0 %v1392
        %1458 = vmatprep.subr.mxu0 %v1395
        %1459 = vmatpush1.msra.mxu0 %v1394
        %1460 = vmatprep.subr.mxu0 %v1397
        %1461 = vmatpush1.msra.mxu0 %v1396
        %1462 = vmatprep.subr.mxu0 %v1399
        %1463 = vmatpush1.msra.mxu0 %v1398
        %1464 = vmatprep.subr.mxu0 %v1401
        %1465 = vmatpush1.msra.mxu0 %v1400
        %1466 = vmatprep.mubr.f32.mxu0 %v632
        %1467 = vmatmul.mubr.f32.gmra.mrb[0].mxu0 %v630
        %v1468 = vpop.f32.mrb[0].mxu0
        %v1469 = vadd.f32 0.0, %v1468
        %v1470 = vpop.f32.mrb[0].mxu0
        %v1471 = vadd.f32 0.0, %v1470
        %1472 = vdwg.mxu0
        %v1473 = vadd.f32 %v1335, %v1469
        %v1474 = vadd.f32 %v1336, %v1471
        %s1475 = scalar_lea.vmem [#allocation4], 3072
        %v1476 = vld [vmem:[%s1475] sm:$0xff]
        %v1477 = vld [vmem:[%s1475 + $0x8] sm:$0xff]
        %v1478 = vld [vmem:[%s1475 + $0x10] sm:$0xff]
        %v1479 = vld [vmem:[%s1475 + $0x18] sm:$0xff]
        %v1480 = vld [vmem:[%s1475 + $0x20] sm:$0xff]
        %v1481 = vld [vmem:[%s1475 + $0x28] sm:$0xff]
        %v1482 = vld [vmem:[%s1475 + $0x30] sm:$0xff]
        %v1483 = vld [vmem:[%s1475 + $0x38] sm:$0xff]
        %v1484 = vld [vmem:[%s1475 + $0x40] sm:$0xff]
        %v1485 = vld [vmem:[%s1475 + $0x48] sm:$0xff]
        %v1486 = vld [vmem:[%s1475 + $0x50] sm:$0xff]
        %v1487 = vld [vmem:[%s1475 + $0x58] sm:$0xff]
        %v1488 = vld [vmem:[%s1475 + $0x60] sm:$0xff]
        %v1489 = vld [vmem:[%s1475 + $0x68] sm:$0xff]
        %v1490 = vld [vmem:[%s1475 + $0x70] sm:$0xff]
        %v1491 = vld [vmem:[%s1475 + $0x78] sm:$0xff]
        %v1492 = vld [vmem:[%s1475 + $0x80] sm:$0xff]
        %v1493 = vld [vmem:[%s1475 + $0x88] sm:$0xff]
        %v1494 = vld [vmem:[%s1475 + $0x90] sm:$0xff]
        %v1495 = vld [vmem:[%s1475 + $0x98] sm:$0xff]
        %v1496 = vld [vmem:[%s1475 + $0xa0] sm:$0xff]
        %v1497 = vld [vmem:[%s1475 + $0xa8] sm:$0xff]
        %v1498 = vld [vmem:[%s1475 + $0xb0] sm:$0xff]
        %v1499 = vld [vmem:[%s1475 + $0xb8] sm:$0xff]
        %v1500 = vld [vmem:[%s1475 + $0xc0] sm:$0xff]
        %v1501 = vld [vmem:[%s1475 + $0xc8] sm:$0xff]
        %v1502 = vld [vmem:[%s1475 + $0xd0] sm:$0xff]
        %v1503 = vld [vmem:[%s1475 + $0xd8] sm:$0xff]
        %v1504 = vld [vmem:[%s1475 + $0xe0] sm:$0xff]
        %v1505 = vld [vmem:[%s1475 + $0xe8] sm:$0xff]
        %v1506 = vld [vmem:[%s1475 + $0xf0] sm:$0xff]
        %v1507 = vld [vmem:[%s1475 + $0xf8] sm:$0xff]
        %v1508 = vld [vmem:[%s1475 + $0x100] sm:$0xff]
        %v1509 = vld [vmem:[%s1475 + $0x108] sm:$0xff]
        %v1510 = vld [vmem:[%s1475 + $0x110] sm:$0xff]
        %v1511 = vld [vmem:[%s1475 + $0x118] sm:$0xff]
        %v1512 = vld [vmem:[%s1475 + $0x120] sm:$0xff]
        %v1513 = vld [vmem:[%s1475 + $0x128] sm:$0xff]
        %v1514 = vld [vmem:[%s1475 + $0x130] sm:$0xff]
        %v1515 = vld [vmem:[%s1475 + $0x138] sm:$0xff]
        %v1516 = vld [vmem:[%s1475 + $0x140] sm:$0xff]
        %v1517 = vld [vmem:[%s1475 + $0x148] sm:$0xff]
        %v1518 = vld [vmem:[%s1475 + $0x150] sm:$0xff]
        %v1519 = vld [vmem:[%s1475 + $0x158] sm:$0xff]
        %v1520 = vld [vmem:[%s1475 + $0x160] sm:$0xff]
        %v1521 = vld [vmem:[%s1475 + $0x168] sm:$0xff]
        %v1522 = vld [vmem:[%s1475 + $0x170] sm:$0xff]
        %v1523 = vld [vmem:[%s1475 + $0x178] sm:$0xff]
        %v1524 = vld [vmem:[%s1475 + $0x180] sm:$0xff]
        %v1525 = vld [vmem:[%s1475 + $0x188] sm:$0xff]
        %v1526 = vld [vmem:[%s1475 + $0x190] sm:$0xff]
        %v1527 = vld [vmem:[%s1475 + $0x198] sm:$0xff]
        %v1528 = vld [vmem:[%s1475 + $0x1a0] sm:$0xff]
        %v1529 = vld [vmem:[%s1475 + $0x1a8] sm:$0xff]
        %v1530 = vld [vmem:[%s1475 + $0x1b0] sm:$0xff]
        %v1531 = vld [vmem:[%s1475 + $0x1b8] sm:$0xff]
        %v1532 = vld [vmem:[%s1475 + $0x1c0] sm:$0xff]
        %v1533 = vld [vmem:[%s1475 + $0x1c8] sm:$0xff]
        %v1534 = vld [vmem:[%s1475 + $0x1d0] sm:$0xff]
        %v1535 = vld [vmem:[%s1475 + $0x1d8] sm:$0xff]
        %v1536 = vld [vmem:[%s1475 + $0x1e0] sm:$0xff]
        %v1537 = vld [vmem:[%s1475 + $0x1e8] sm:$0xff]
        %v1538 = vld [vmem:[%s1475 + $0x1f0] sm:$0xff]
        %v1539 = vld [vmem:[%s1475 + $0x1f8] sm:$0xff]
        %1540 = vmatprep.subr.mxu0 %v1477
        %1541 = vmatpush1.msra.mxu0 %v1476
        %1542 = vmatprep.subr.mxu0 %v1479
        %1543 = vmatpush1.msra.mxu0 %v1478
        %1544 = vmatprep.subr.mxu0 %v1481
        %1545 = vmatpush1.msra.mxu0 %v1480
        %1546 = vmatprep.subr.mxu0 %v1483
        %1547 = vmatpush1.msra.mxu0 %v1482
        %1548 = vmatprep.subr.mxu0 %v1485
        %1549 = vmatpush1.msra.mxu0 %v1484
        %1550 = vmatprep.subr.mxu0 %v1487
        %1551 = vmatpush1.msra.mxu0 %v1486
        %1552 = vmatprep.subr.mxu0 %v1489
        %1553 = vmatpush1.msra.mxu0 %v1488
        %1554 = vmatprep.subr.mxu0 %v1491
        %1555 = vmatpush1.msra.mxu0 %v1490
        %1556 = vmatprep.subr.mxu0 %v1493
        %1557 = vmatpush1.msra.mxu0 %v1492
        %1558 = vmatprep.subr.mxu0 %v1495
        %1559 = vmatpush1.msra.mxu0 %v1494
        %1560 = vmatprep.subr.mxu0 %v1497
        %1561 = vmatpush1.msra.mxu0 %v1496
        %1562 = vmatprep.subr.mxu0 %v1499
        %1563 = vmatpush1.msra.mxu0 %v1498
        %1564 = vmatprep.subr.mxu0 %v1501
        %1565 = vmatpush1.msra.mxu0 %v1500
        %1566 = vmatprep.subr.mxu0 %v1503
        %1567 = vmatpush1.msra.mxu0 %v1502
        %1568 = vmatprep.subr.mxu0 %v1505
        %1569 = vmatpush1.msra.mxu0 %v1504
        %1570 = vmatprep.subr.mxu0 %v1507
        %1571 = vmatpush1.msra.mxu0 %v1506
        %1572 = vmatprep.subr.mxu0 %v1509
        %1573 = vmatpush1.msra.mxu0 %v1508
        %1574 = vmatprep.subr.mxu0 %v1511
        %1575 = vmatpush1.msra.mxu0 %v1510
        %1576 = vmatprep.subr.mxu0 %v1513
        %1577 = vmatpush1.msra.mxu0 %v1512
        %1578 = vmatprep.subr.mxu0 %v1515
        %1579 = vmatpush1.msra.mxu0 %v1514
        %1580 = vmatprep.subr.mxu0 %v1517
        %1581 = vmatpush1.msra.mxu0 %v1516
        %1582 = vmatprep.subr.mxu0 %v1519
        %1583 = vmatpush1.msra.mxu0 %v1518
        %1584 = vmatprep.subr.mxu0 %v1521
        %1585 = vmatpush1.msra.mxu0 %v1520
        %1586 = vmatprep.subr.mxu0 %v1523
        %1587 = vmatpush1.msra.mxu0 %v1522
        %1588 = vmatprep.subr.mxu0 %v1525
        %1589 = vmatpush1.msra.mxu0 %v1524
        %1590 = vmatprep.subr.mxu0 %v1527
        %1591 = vmatpush1.msra.mxu0 %v1526
        %1592 = vmatprep.subr.mxu0 %v1529
        %1593 = vmatpush1.msra.mxu0 %v1528
        %1594 = vmatprep.subr.mxu0 %v1531
        %1595 = vmatpush1.msra.mxu0 %v1530
        %1596 = vmatprep.subr.mxu0 %v1533
        %1597 = vmatpush1.msra.mxu0 %v1532
        %1598 = vmatprep.subr.mxu0 %v1535
        %1599 = vmatpush1.msra.mxu0 %v1534
        %1600 = vmatprep.subr.mxu0 %v1537
        %1601 = vmatpush1.msra.mxu0 %v1536
        %1602 = vmatprep.subr.mxu0 %v1539
        %1603 = vmatpush1.msra.mxu0 %v1538
        %1604 = vmatprep.mubr.f32.mxu0 %v638
        %1605 = vmatmul.mubr.f32.gmra.mrb[0].mxu0 %v636
        %v1606 = vpop.f32.mrb[0].mxu0
        %v1607 = vadd.f32 0.0, %v1606
        %v1608 = vpop.f32.mrb[0].mxu0
        %v1609 = vadd.f32 0.0, %v1608
        %1610 = vdwg.mxu0
        %v1611 = vadd.f32 %v1473, %v1607
        %v1612 = vadd.f32 %v1474, %v1609
        %s1613 = scalar_lea.vmem [#allocation4], 3584
        %v1614 = vld [vmem:[%s1613] sm:$0xff]
        %v1615 = vld [vmem:[%s1613 + $0x8] sm:$0xff]
        %v1616 = vld [vmem:[%s1613 + $0x10] sm:$0xff]
        %v1617 = vld [vmem:[%s1613 + $0x18] sm:$0xff]
        %v1618 = vld [vmem:[%s1613 + $0x20] sm:$0xff]
        %v1619 = vld [vmem:[%s1613 + $0x28] sm:$0xff]
        %v1620 = vld [vmem:[%s1613 + $0x30] sm:$0xff]
        %v1621 = vld [vmem:[%s1613 + $0x38] sm:$0xff]
        %v1622 = vld [vmem:[%s1613 + $0x40] sm:$0xff]
        %v1623 = vld [vmem:[%s1613 + $0x48] sm:$0xff]
        %v1624 = vld [vmem:[%s1613 + $0x50] sm:$0xff]
        %v1625 = vld [vmem:[%s1613 + $0x58] sm:$0xff]
        %v1626 = vld [vmem:[%s1613 + $0x60] sm:$0xff]
        %v1627 = vld [vmem:[%s1613 + $0x68] sm:$0xff]
        %v1628 = vld [vmem:[%s1613 + $0x70] sm:$0xff]
        %v1629 = vld [vmem:[%s1613 + $0x78] sm:$0xff]
        %v1630 = vld [vmem:[%s1613 + $0x80] sm:$0xff]
        %v1631 = vld [vmem:[%s1613 + $0x88] sm:$0xff]
        %v1632 = vld [vmem:[%s1613 + $0x90] sm:$0xff]
        %v1633 = vld [vmem:[%s1613 + $0x98] sm:$0xff]
        %v1634 = vld [vmem:[%s1613 + $0xa0] sm:$0xff]
        %v1635 = vld [vmem:[%s1613 + $0xa8] sm:$0xff]
        %v1636 = vld [vmem:[%s1613 + $0xb0] sm:$0xff]
        %v1637 = vld [vmem:[%s1613 + $0xb8] sm:$0xff]
        %v1638 = vld [vmem:[%s1613 + $0xc0] sm:$0xff]
        %v1639 = vld [vmem:[%s1613 + $0xc8] sm:$0xff]
        %v1640 = vld [vmem:[%s1613 + $0xd0] sm:$0xff]
        %v1641 = vld [vmem:[%s1613 + $0xd8] sm:$0xff]
        %v1642 = vld [vmem:[%s1613 + $0xe0] sm:$0xff]
        %v1643 = vld [vmem:[%s1613 + $0xe8] sm:$0xff]
        %v1644 = vld [vmem:[%s1613 + $0xf0] sm:$0xff]
        %v1645 = vld [vmem:[%s1613 + $0xf8] sm:$0xff]
        %v1646 = vld [vmem:[%s1613 + $0x100] sm:$0xff]
        %v1647 = vld [vmem:[%s1613 + $0x108] sm:$0xff]
        %v1648 = vld [vmem:[%s1613 + $0x110] sm:$0xff]
        %v1649 = vld [vmem:[%s1613 + $0x118] sm:$0xff]
        %v1650 = vld [vmem:[%s1613 + $0x120] sm:$0xff]
        %v1651 = vld [vmem:[%s1613 + $0x128] sm:$0xff]
        %v1652 = vld [vmem:[%s1613 + $0x130] sm:$0xff]
        %v1653 = vld [vmem:[%s1613 + $0x138] sm:$0xff]
        %v1654 = vld [vmem:[%s1613 + $0x140] sm:$0xff]
        %v1655 = vld [vmem:[%s1613 + $0x148] sm:$0xff]
        %v1656 = vld [vmem:[%s1613 + $0x150] sm:$0xff]
        %v1657 = vld [vmem:[%s1613 + $0x158] sm:$0xff]
        %v1658 = vld [vmem:[%s1613 + $0x160] sm:$0xff]
        %v1659 = vld [vmem:[%s1613 + $0x168] sm:$0xff]
        %v1660 = vld [vmem:[%s1613 + $0x170] sm:$0xff]
        %v1661 = vld [vmem:[%s1613 + $0x178] sm:$0xff]
        %v1662 = vld [vmem:[%s1613 + $0x180] sm:$0xff]
        %v1663 = vld [vmem:[%s1613 + $0x188] sm:$0xff]
        %v1664 = vld [vmem:[%s1613 + $0x190] sm:$0xff]
        %v1665 = vld [vmem:[%s1613 + $0x198] sm:$0xff]
        %v1666 = vld [vmem:[%s1613 + $0x1a0] sm:$0xff]
        %v1667 = vld [vmem:[%s1613 + $0x1a8] sm:$0xff]
        %v1668 = vld [vmem:[%s1613 + $0x1b0] sm:$0xff]
        %v1669 = vld [vmem:[%s1613 + $0x1b8] sm:$0xff]
        %v1670 = vld [vmem:[%s1613 + $0x1c0] sm:$0xff]
        %v1671 = vld [vmem:[%s1613 + $0x1c8] sm:$0xff]
        %v1672 = vld [vmem:[%s1613 + $0x1d0] sm:$0xff]
        %v1673 = vld [vmem:[%s1613 + $0x1d8] sm:$0xff]
        %v1674 = vld [vmem:[%s1613 + $0x1e0] sm:$0xff]
        %v1675 = vld [vmem:[%s1613 + $0x1e8] sm:$0xff]
        %v1676 = vld [vmem:[%s1613 + $0x1f0] sm:$0xff]
        %v1677 = vld [vmem:[%s1613 + $0x1f8] sm:$0xff]
        %1678 = vmatprep.subr.mxu0 %v1615
        %1679 = vmatpush1.msra.mxu0 %v1614
        %1680 = vmatprep.subr.mxu0 %v1617
        %1681 = vmatpush1.msra.mxu0 %v1616
        %1682 = vmatprep.subr.mxu0 %v1619
        %1683 = vmatpush1.msra.mxu0 %v1618
        %1684 = vmatprep.subr.mxu0 %v1621
        %1685 = vmatpush1.msra.mxu0 %v1620
        %1686 = vmatprep.subr.mxu0 %v1623
        %1687 = vmatpush1.msra.mxu0 %v1622
        %1688 = vmatprep.subr.mxu0 %v1625
        %1689 = vmatpush1.msra.mxu0 %v1624
        %1690 = vmatprep.subr.mxu0 %v1627
        %1691 = vmatpush1.msra.mxu0 %v1626
        %1692 = vmatprep.subr.mxu0 %v1629
        %1693 = vmatpush1.msra.mxu0 %v1628
        %1694 = vmatprep.subr.mxu0 %v1631
        %1695 = vmatpush1.msra.mxu0 %v1630
        %1696 = vmatprep.subr.mxu0 %v1633
        %1697 = vmatpush1.msra.mxu0 %v1632
        %1698 = vmatprep.subr.mxu0 %v1635
        %1699 = vmatpush1.msra.mxu0 %v1634
        %1700 = vmatprep.subr.mxu0 %v1637
        %1701 = vmatpush1.msra.mxu0 %v1636
        %1702 = vmatprep.subr.mxu0 %v1639
        %1703 = vmatpush1.msra.mxu0 %v1638
        %1704 = vmatprep.subr.mxu0 %v1641
        %1705 = vmatpush1.msra.mxu0 %v1640
        %1706 = vmatprep.subr.mxu0 %v1643
        %1707 = vmatpush1.msra.mxu0 %v1642
        %1708 = vmatprep.subr.mxu0 %v1645
        %1709 = vmatpush1.msra.mxu0 %v1644
        %1710 = vmatprep.subr.mxu0 %v1647
        %1711 = vmatpush1.msra.mxu0 %v1646
        %1712 = vmatprep.subr.mxu0 %v1649
        %1713 = vmatpush1.msra.mxu0 %v1648
        %1714 = vmatprep.subr.mxu0 %v1651
        %1715 = vmatpush1.msra.mxu0 %v1650
        %1716 = vmatprep.subr.mxu0 %v1653
        %1717 = vmatpush1.msra.mxu0 %v1652
        %1718 = vmatprep.subr.mxu0 %v1655
        %1719 = vmatpush1.msra.mxu0 %v1654
        %1720 = vmatprep.subr.mxu0 %v1657
        %1721 = vmatpush1.msra.mxu0 %v1656
        %1722 = vmatprep.subr.mxu0 %v1659
        %1723 = vmatpush1.msra.mxu0 %v1658
        %1724 = vmatprep.subr.mxu0 %v1661
        %1725 = vmatpush1.msra.mxu0 %v1660
        %1726 = vmatprep.subr.mxu0 %v1663
        %1727 = vmatpush1.msra.mxu0 %v1662
        %1728 = vmatprep.subr.mxu0 %v1665
        %1729 = vmatpush1.msra.mxu0 %v1664
        %1730 = vmatprep.subr.mxu0 %v1667
        %1731 = vmatpush1.msra.mxu0 %v1666
        %1732 = vmatprep.subr.mxu0 %v1669
        %1733 = vmatpush1.msra.mxu0 %v1668
        %1734 = vmatprep.subr.mxu0 %v1671
        %1735 = vmatpush1.msra.mxu0 %v1670
        %1736 = vmatprep.subr.mxu0 %v1673
        %1737 = vmatpush1.msra.mxu0 %v1672
        %1738 = vmatprep.subr.mxu0 %v1675
        %1739 = vmatpush1.msra.mxu0 %v1674
        %1740 = vmatprep.subr.mxu0 %v1677
        %1741 = vmatpush1.msra.mxu0 %v1676
        %1742 = vmatprep.mubr.f32.mxu0 %v644
        %1743 = vmatmul.mubr.f32.gmra.mrb[0].mxu0 %v642
        %v1744 = vpop.f32.mrb[0].mxu0
        %v1745 = vadd.f32 0.0, %v1744
        %v1746 = vpop.f32.mrb[0].mxu0
        %v1747 = vadd.f32 0.0, %v1746
        %1748 = vdwg.mxu0
        %v1749 = vadd.f32 %v1611, %v1745
        %v1750 = vadd.f32 %v1612, %v1747
        %s1751 = scalar_lea.vmem [#allocation4], 4096
        %v1752 = vld [vmem:[%s1751] sm:$0xff]
        %v1753 = vld [vmem:[%s1751 + $0x8] sm:$0xff]
        %v1754 = vld [vmem:[%s1751 + $0x10] sm:$0xff]
        %v1755 = vld [vmem:[%s1751 + $0x18] sm:$0xff]
        %v1756 = vld [vmem:[%s1751 + $0x20] sm:$0xff]
        %v1757 = vld [vmem:[%s1751 + $0x28] sm:$0xff]
        %v1758 = vld [vmem:[%s1751 + $0x30] sm:$0xff]
        %v1759 = vld [vmem:[%s1751 + $0x38] sm:$0xff]
        %v1760 = vld [vmem:[%s1751 + $0x40] sm:$0xff]
        %v1761 = vld [vmem:[%s1751 + $0x48] sm:$0xff]
        %v1762 = vld [vmem:[%s1751 + $0x50] sm:$0xff]
        %v1763 = vld [vmem:[%s1751 + $0x58] sm:$0xff]
        %v1764 = vld [vmem:[%s1751 + $0x60] sm:$0xff]
        %v1765 = vld [vmem:[%s1751 + $0x68] sm:$0xff]
        %v1766 = vld [vmem:[%s1751 + $0x70] sm:$0xff]
        %v1767 = vld [vmem:[%s1751 + $0x78] sm:$0xff]
        %v1768 = vld [vmem:[%s1751 + $0x80] sm:$0xff]
        %v1769 = vld [vmem:[%s1751 + $0x88] sm:$0xff]
        %v1770 = vld [vmem:[%s1751 + $0x90] sm:$0xff]
        %v1771 = vld [vmem:[%s1751 + $0x98] sm:$0xff]
        %v1772 = vld [vmem:[%s1751 + $0xa0] sm:$0xff]
        %v1773 = vld [vmem:[%s1751 + $0xa8] sm:$0xff]
        %v1774 = vld [vmem:[%s1751 + $0xb0] sm:$0xff]
        %v1775 = vld [vmem:[%s1751 + $0xb8] sm:$0xff]
        %v1776 = vld [vmem:[%s1751 + $0xc0] sm:$0xff]
        %v1777 = vld [vmem:[%s1751 + $0xc8] sm:$0xff]
        %v1778 = vld [vmem:[%s1751 + $0xd0] sm:$0xff]
        %v1779 = vld [vmem:[%s1751 + $0xd8] sm:$0xff]
        %v1780 = vld [vmem:[%s1751 + $0xe0] sm:$0xff]
        %v1781 = vld [vmem:[%s1751 + $0xe8] sm:$0xff]
        %v1782 = vld [vmem:[%s1751 + $0xf0] sm:$0xff]
        %v1783 = vld [vmem:[%s1751 + $0xf8] sm:$0xff]
        %v1784 = vld [vmem:[%s1751 + $0x100] sm:$0xff]
        %v1785 = vld [vmem:[%s1751 + $0x108] sm:$0xff]
        %v1786 = vld [vmem:[%s1751 + $0x110] sm:$0xff]
        %v1787 = vld [vmem:[%s1751 + $0x118] sm:$0xff]
        %v1788 = vld [vmem:[%s1751 + $0x120] sm:$0xff]
        %v1789 = vld [vmem:[%s1751 + $0x128] sm:$0xff]
        %v1790 = vld [vmem:[%s1751 + $0x130] sm:$0xff]
        %v1791 = vld [vmem:[%s1751 + $0x138] sm:$0xff]
        %v1792 = vld [vmem:[%s1751 + $0x140] sm:$0xff]
        %v1793 = vld [vmem:[%s1751 + $0x148] sm:$0xff]
        %v1794 = vld [vmem:[%s1751 + $0x150] sm:$0xff]
        %v1795 = vld [vmem:[%s1751 + $0x158] sm:$0xff]
        %v1796 = vld [vmem:[%s1751 + $0x160] sm:$0xff]
        %v1797 = vld [vmem:[%s1751 + $0x168] sm:$0xff]
        %v1798 = vld [vmem:[%s1751 + $0x170] sm:$0xff]
        %v1799 = vld [vmem:[%s1751 + $0x178] sm:$0xff]
        %v1800 = vld [vmem:[%s1751 + $0x180] sm:$0xff]
        %v1801 = vld [vmem:[%s1751 + $0x188] sm:$0xff]
        %v1802 = vld [vmem:[%s1751 + $0x190] sm:$0xff]
        %v1803 = vld [vmem:[%s1751 + $0x198] sm:$0xff]
        %v1804 = vld [vmem:[%s1751 + $0x1a0] sm:$0xff]
        %v1805 = vld [vmem:[%s1751 + $0x1a8] sm:$0xff]
        %v1806 = vld [vmem:[%s1751 + $0x1b0] sm:$0xff]
        %v1807 = vld [vmem:[%s1751 + $0x1b8] sm:$0xff]
        %v1808 = vld [vmem:[%s1751 + $0x1c0] sm:$0xff]
        %v1809 = vld [vmem:[%s1751 + $0x1c8] sm:$0xff]
        %v1810 = vld [vmem:[%s1751 + $0x1d0] sm:$0xff]
        %v1811 = vld [vmem:[%s1751 + $0x1d8] sm:$0xff]
        %v1812 = vld [vmem:[%s1751 + $0x1e0] sm:$0xff]
        %v1813 = vld [vmem:[%s1751 + $0x1e8] sm:$0xff]
        %v1814 = vld [vmem:[%s1751 + $0x1f0] sm:$0xff]
        %v1815 = vld [vmem:[%s1751 + $0x1f8] sm:$0xff]
        %1816 = vmatprep.subr.mxu0 %v1753
        %1817 = vmatpush1.msra.mxu0 %v1752
        %1818 = vmatprep.subr.mxu0 %v1755
        %1819 = vmatpush1.msra.mxu0 %v1754
        %1820 = vmatprep.subr.mxu0 %v1757
        %1821 = vmatpush1.msra.mxu0 %v1756
        %1822 = vmatprep.subr.mxu0 %v1759
        %1823 = vmatpush1.msra.mxu0 %v1758
        %1824 = vmatprep.subr.mxu0 %v1761
        %1825 = vmatpush1.msra.mxu0 %v1760
        %1826 = vmatprep.subr.mxu0 %v1763
        %1827 = vmatpush1.msra.mxu0 %v1762
        %1828 = vmatprep.subr.mxu0 %v1765
        %1829 = vmatpush1.msra.mxu0 %v1764
        %1830 = vmatprep.subr.mxu0 %v1767
        %1831 = vmatpush1.msra.mxu0 %v1766
        %1832 = vmatprep.subr.mxu0 %v1769
        %1833 = vmatpush1.msra.mxu0 %v1768
        %1834 = vmatprep.subr.mxu0 %v1771
        %1835 = vmatpush1.msra.mxu0 %v1770
        %1836 = vmatprep.subr.mxu0 %v1773
        %1837 = vmatpush1.msra.mxu0 %v1772
        %1838 = vmatprep.subr.mxu0 %v1775
        %1839 = vmatpush1.msra.mxu0 %v1774
        %1840 = vmatprep.subr.mxu0 %v1777
        %1841 = vmatpush1.msra.mxu0 %v1776
        %1842 = vmatprep.subr.mxu0 %v1779
        %1843 = vmatpush1.msra.mxu0 %v1778
        %1844 = vmatprep.subr.mxu0 %v1781
        %1845 = vmatpush1.msra.mxu0 %v1780
        %1846 = vmatprep.subr.mxu0 %v1783
        %1847 = vmatpush1.msra.mxu0 %v1782
        %1848 = vmatprep.subr.mxu0 %v1785
        %1849 = vmatpush1.msra.mxu0 %v1784
        %1850 = vmatprep.subr.mxu0 %v1787
        %1851 = vmatpush1.msra.mxu0 %v1786
        %1852 = vmatprep.subr.mxu0 %v1789
        %1853 = vmatpush1.msra.mxu0 %v1788
        %1854 = vmatprep.subr.mxu0 %v1791
        %1855 = vmatpush1.msra.mxu0 %v1790
        %1856 = vmatprep.subr.mxu0 %v1793
        %1857 = vmatpush1.msra.mxu0 %v1792
        %1858 = vmatprep.subr.mxu0 %v1795
        %1859 = vmatpush1.msra.mxu0 %v1794
        %1860 = vmatprep.subr.mxu0 %v1797
        %1861 = vmatpush1.msra.mxu0 %v1796
        %1862 = vmatprep.subr.mxu0 %v1799
        %1863 = vmatpush1.msra.mxu0 %v1798
        %1864 = vmatprep.subr.mxu0 %v1801
        %1865 = vmatpush1.msra.mxu0 %v1800
        %1866 = vmatprep.subr.mxu0 %v1803
        %1867 = vmatpush1.msra.mxu0 %v1802
        %1868 = vmatprep.subr.mxu0 %v1805
        %1869 = vmatpush1.msra.mxu0 %v1804
        %1870 = vmatprep.subr.mxu0 %v1807
        %1871 = vmatpush1.msra.mxu0 %v1806
        %1872 = vmatprep.subr.mxu0 %v1809
        %1873 = vmatpush1.msra.mxu0 %v1808
        %1874 = vmatprep.subr.mxu0 %v1811
        %1875 = vmatpush1.msra.mxu0 %v1810
        %1876 = vmatprep.subr.mxu0 %v1813
        %1877 = vmatpush1.msra.mxu0 %v1812
        %1878 = vmatprep.subr.mxu0 %v1815
        %1879 = vmatpush1.msra.mxu0 %v1814
        %1880 = vmatprep.mubr.f32.mxu0 %v650
        %1881 = vmatmul.mubr.f32.gmra.mrb[0].mxu0 %v648
        %v1882 = vpop.f32.mrb[0].mxu0
        %v1883 = vadd.f32 0.0, %v1882
        %v1884 = vpop.f32.mrb[0].mxu0
        %v1885 = vadd.f32 0.0, %v1884
        %1886 = vdwg.mxu0
        %v1887 = vadd.f32 %v1749, %v1883
        %v1888 = vadd.f32 %v1750, %v1885
        %v1889 = vld [vmem:[%s5] sm:$0xff]
        %1891 = vset.pattern.permute.xlu0 0
        %1892 = vperm.xlu0 %1891, %v1889
        %v1893 = vpop.permute.xlu0 %1892
        %v1895 = vmul.f32 %v1887, %v1893
        %v1896 = vmul.f32 %v1888, %v1893
        %v1897 = vld [vmem:[%s6] sm:$0xff]
        %1899 = vset.pattern.permute.xlu0 0
        %1900 = vperm.xlu0 %1899, %v1897
        %v1901 = vpop.permute.xlu0 %1900
        %v1903 = vadd.f32 %v1895, %v1901
        %v1904 = vadd.f32 %v1896, %v1901
        %vm1905 = vcmp.ge.f32.partialorder %v1903, 0.0
        %vm1906 = vcmp.ge.f32.partialorder %v1904, 0.0
        %v1907 = vmul.f32 %v1903, 0.3
        %v1908 = vmul.f32 %v1904, 0.3
        %v1909 = vsel %vm1905, %v1903, %v1907
        %v1910 = vsel %vm1906, %v1904, %v1908
        %v1911 = vadd.f32 %v1909, %v494
        %v1912 = vadd.f32 %v1910, %v495
        %1913 = vst [vmem:[%s362] sm:$0xff] %v1911
        %1914 = vst [vmem:[%s362 + $0x8] sm:$0xff] %v1912
        %p1915 = scmp.lt.s32.totalorder %s22, 1
        %s1916 = scalar_select %p1915, %s22, 1
        %s1917 = smul.addr %s1916, 2
        %s1918 = smul.addr %s1917, 8
        %s1919 = scalar_lea.vmem %s9, %s1918
        // Predicated region
        $region65: #{residual_block.1} parent=55 // pred_check
          %p1920 = pneg %p234
        $region66: #{residual_block.1} parent=55 // pred_check_branch
          %1922 = sbr.rel (%p1920) target = $region68
        $region67: #{residual_block.1} parent=55 // pred_region
          _
        $region68: #{residual_block.1} parent=55 // pred_fallthru
          _
      $region56: #{residual_block.1} parent=5 // pred_fallthru
        _
      %p1923 = scmp.le.s32.totalorder 2, %s17
      // Predicated region
      $region69: #{residual_block.1} parent=5 // pred_check
        %p1924 = pneg %p1923
      $region70: #{residual_block.1} parent=5 // pred_check_branch
        %1926 = sbr.rel (%p1924) target = $region72
      $region71: #{residual_block.1} parent=5 // pred_region
        %s1927 = ssub.s32 %s17, 2
        // Predicated region
        $region73: #{residual_block.1} parent=71 // pred_check
          %p1928 = pneg %p240
        $region74: #{residual_block.1} parent=71 // pred_check_branch
          %1930 = sbr.rel (%p1928) target = $region76
        $region75: #{residual_block.1} parent=71 // pred_region
          %p1931 = scmp.lt.s32.totalorder %s23, 1
          %s1932 = scalar_select %p1931, %s23, 1
          %s1933 = smul.addr %s1932, 2
          %s1934 = smul.addr %s1933, 8
          %s1935 = scalar_lea.vmem %s9, %s1934
        $region76: #{residual_block.1} parent=71 // pred_fallthru
          _
      $region72: #{residual_block.1} parent=5 // pred_fallthru
        _
    $region6: #{residual_block.1} parent=1 // loop_footer
      %s21 = sadd.s32 1, %s17
    $region7: #{residual_block.1} parent=1 // loop_footer_branch
      %16 = sbr.rel target = $region3
    $region8: #{residual_block.1} parent=1 // loop_exit
      _
    %1936 = vsyncpa [#allocation3], 1
    %s1937 = scalar_lea.sflag [#allocation3], 1
    %1938 = vsyncpa %s1937, 1
    %1939 = vsyncpa [#allocation5], 1

</llo_original>
